<compile_context>
chip_gen: v7x
topology: tpu7x:2x2x1
jax: 0.10.0
libtpu: 0.0.40
codegen_flags: <defaults>
</compile_context>

<pallas_src>
import functools

import numpy as np
import jax
import jax.numpy as jnp
from jax.experimental import pallas as pl
from jax.experimental.pallas import tpu as pltpu


def _bilinear_matrix(out_size: int, in_size: int) -> np.ndarray:
    """PyTorch F.interpolate(mode='bilinear', align_corners=False) as a 1-D matrix."""
    a = np.zeros((out_size, in_size), dtype=np.float32)
    if in_size == 1:
        a[:, 0] = 1.0
        return a
    scale = in_size / out_size
    for d in range(out_size):
        src = (d + 0.5) * scale - 0.5
        src = max(src, 0.0)                      # PyTorch clamps the source coord at 0
        i0 = min(int(np.floor(src)), in_size - 1)
        i1 = min(i0 + 1, in_size - 1)
        w1 = src - i0
        a[d, i0] += 1.0 - w1
        a[d, i1] += w1
    return a


def _pick_m_tile(m: int, max_lanes: int = 4096) -> int:
    """Largest multiple-of-128 divisor of m up to max_lanes; else the full extent."""
    if m <= max_lanes or m % 128 != 0:
        return m                      # full-dim block (always legal)
    for cand in range(max_lanes, 0, -128):
        if m % cand == 0:
            return cand
    return m


def _pick_class_block(n_cls: int, h: int, w: int, ho: int,
                      budget_bytes: int = 8 << 20) -> int:
    """Classes per upsample grid step, bounded so the f32 output block stays modest."""
    if n_cls * h * w * 4 <= budget_bytes or ho % 8 != 0:
        return n_cls
    for cb in range(n_cls, 0, -1):
        if n_cls % cb == 0 and cb * h * w * 4 <= budget_bytes:
            return cb
    return 1


def _conv_classifier_kernel(cols_ref, w1_ref, b1_ref, w2_ref, b2_ref,
                            feat_ref, logits_ref):
    """Fused 3x3 stride-2 conv (single K=9*Cin bf16 matmul) + bias + ReLU + 1x1 classifier.

    Channel-major: the spatial tile (TM of Ho*Wo) is on the lane axis, channels on
    sublanes, so all loads/stores are lane-dense and outputs need no transpose.
    """
    cols = cols_ref[0]                                                     # (K9, TM) bf16
    acc = jnp.dot(w1_ref[...], cols, preferred_element_type=jnp.float32)   # (Cmid, TM) f32
    feat = jnp.maximum(acc + b1_ref[...], 0.0)                             # f32 epilogue
    feat_ref[0] = feat.astype(feat_ref.dtype)
    logits = jnp.dot(w2_ref[...], feat.astype(jnp.bfloat16),
                     preferred_element_type=jnp.float32) + b2_ref[...]     # (Cnum, TM)
    logits_ref[0] = logits.astype(logits_ref.dtype)


def _bilinear_kernel(l_ref, awt_ref, ah_ref, o_ref, *, ho, n_cls):
    """Separable bilinear upsample of a block of classes: A_h @ (L_c @ A_w^T)."""
    # One fused width-pass matmul over all classes in the block (lane-dense on W),
    # then per-class height-pass matmuls -- all inside a single grid step so the
    # fixed per-step overhead is amortized across classes.
    t = jnp.dot(l_ref[0], awt_ref[...],
                preferred_element_type=jnp.float32)                        # (CB*Ho, W)
    for c in range(n_cls):                                                 # static unroll
        tc = t[c * ho:(c + 1) * ho, :].astype(jnp.bfloat16)                # (Ho, W)
        o_ref[0, c] = jnp.dot(ah_ref[...], tc,
                              preferred_element_type=jnp.float32).astype(o_ref.dtype)


def simple_segmentation_forward(x_nchw, w_bb, b_bb, w_cls, b_cls):
    """Mirrors _SimpleSegmentationModel.forward: returns (upsampled_logits, interm_out)."""
    N, Cin, H, W = x_nchw.shape
    KH = KW = 3
    stride = 2
    Cmid = w_bb.shape[-1]
    Cnum = w_cls.shape[-1]
    Ho, Wo = H // stride, W // stride
    M = Ho * Wo
    K9 = KH * KW * Cin

    # ---- glue: zero-pad + channel-major im2col (spatial already on the lane axis) ----
    # cols[n, (kh*KW+kw)*Cin + c, oh*Wo + ow] = x[n, c, 2*oh+kh-1, 2*ow+kw-1]
    # TODO(synk): for very large inputs, move this unfold into kernel 1 via a halo'd
    # BlockSpec / in-kernel strided slices to drop the extra HBM pass over the patches.
    xp = jnp.pad(x_nchw.astype(jnp.bfloat16), ((0, 0), (0, 0), (1, 1), (1, 1)))
    taps = [xp[:, :, kh:kh + stride * Ho:stride, kw:kw + stride * Wo:stride]
            for kh in range(KH) for kw in range(KW)]                  # 9 x (N, Cin, Ho, Wo)
    cols = jnp.concatenate(taps, axis=1).reshape(N, K9, M)            # (N, K9, Ho*Wo) bf16

    # channel-major weights: bf16 MXU operands, f32 accumulate / epilogue
    w1 = w_bb.reshape(K9, Cmid).T.astype(jnp.bfloat16)                # (Cmid, K9)
    b1 = b_bb.reshape(Cmid, 1).astype(jnp.float32)
    w2 = w_cls.T.astype(jnp.bfloat16)                                 # (Cnum, Cmid)
    b2 = b_cls.reshape(Cnum, 1).astype(jnp.float32)

    TM = _pick_m_tile(M)

    # ---- kernel 1: fused conv + ReLU + classifier, grid over (batch, spatial tile) ----
    # TODO(synk): on v7x consider pltpu.CORE_PARALLEL on the leading axis if plain
    # "parallel" does not shard the grid across both TensorCores.
    feat, logits = pl.pallas_call(
        _conv_classifier_kernel,
        out_shape=(jax.ShapeDtypeStruct((N, Cmid, M), jnp.float32),
                   jax.ShapeDtypeStruct((N, Cnum, M), jnp.bfloat16)),
        grid=(N, M // TM),
        in_specs=[
            pl.BlockSpec((1, K9, TM), lambda n, m: (n, 0, m)),
            pl.BlockSpec((Cmid, K9), lambda n, m: (0, 0)),
            pl.BlockSpec((Cmid, 1), lambda n, m: (0, 0)),
            pl.BlockSpec((Cnum, Cmid), lambda n, m: (0, 0)),
            pl.BlockSpec((Cnum, 1), lambda n, m: (0, 0)),
        ],
        out_specs=(pl.BlockSpec((1, Cmid, TM), lambda n, m: (n, 0, m)),
                   pl.BlockSpec((1, Cnum, TM), lambda n, m: (n, 0, m))),
        compiler_params=pltpu.CompilerParams(
            dimension_semantics=("parallel", "parallel"),
            vmem_limit_bytes=48 * 1024 * 1024),   # < v7x's 64 MiB physical VMEM
    )(cols, w1, b1, w2, b2)

    # logits are already channel-major; (N, Cnum, Ho*Wo) -> (N, Cnum*Ho, Wo) is a free
    # row-major reshape (no transpose, no extra HBM pass).
    logits_flat = logits.reshape(N, Cnum * Ho, Wo)

    # separable bilinear matrices (PyTorch align_corners=False), built at trace time
    a_h = jnp.asarray(_bilinear_matrix(H, Ho), dtype=jnp.bfloat16)        # (H, Ho)
    a_wt = jnp.asarray(_bilinear_matrix(W, Wo).T, dtype=jnp.bfloat16)     # (Wo, W)

    CB = _pick_class_block(Cnum, H, W, Ho)

    # ---- kernel 2: separable bilinear upsample, grid over (batch, class block) -------
    out = pl.pallas_call(
        functools.partial(_bilinear_kernel, ho=Ho, n_cls=CB),
        out_shape=jax.ShapeDtypeStruct((N, Cnum, H, W), jnp.float32),
        grid=(N, Cnum // CB),
        in_specs=[
            pl.BlockSpec((1, CB * Ho, Wo), lambda n, cb: (n, cb, 0)),
            pl.BlockSpec((Wo, W), lambda n, cb: (0, 0)),
            pl.BlockSpec((H, Ho), lambda n, cb: (0, 0)),
        ],
        out_specs=pl.BlockSpec((1, CB, H, W), lambda n, cb: (n, cb, 0, 0)),
        compiler_params=pltpu.CompilerParams(
            dimension_semantics=("parallel", "parallel"),
            vmem_limit_bytes=48 * 1024 * 1024),
    )(logits_flat, a_wt, a_h)                              # native NCHW, lane-dense on W

    # interm features: already channel-major, reshape to NCHW for free
    interm_out = feat.reshape(N, Cmid, Ho, Wo)
    return out, interm_out


if __name__ == "__main__":
    key = jax.random.PRNGKey(0)
    N, Cin, H, W = 2, 4, 16, 16
    Cmid, Cnum = 8, 6
    Ho, Wo = H // 2, W // 2

    k1, k2, k3, k4, k5 = jax.random.split(key, 5)
    x = jax.random.normal(k1, (N, Cin, H, W), dtype=jnp.float32)
    w_bb = 0.1 * jax.random.normal(k2, (3, 3, Cin, Cmid), dtype=jnp.float32)
    b_bb = 0.1 * jax.random.normal(k3, (Cmid,), dtype=jnp.float32)
    w_cls = 0.1 * jax.random.normal(k4, (Cmid, Cnum), dtype=jnp.float32)
    b_cls = 0.1 * jax.random.normal(k5, (Cnum,), dtype=jnp.float32)

    out, interm = jax.jit(simple_segmentation_forward)(x, w_bb, b_bb, w_cls, b_cls)
    jax.block_until_ready((out, interm))

    assert out.shape == (N, Cnum, H, W), out.shape
    assert interm.shape == (N, Cmid, Ho, Wo), interm.shape

    # Pure-JAX f32 reference of the same math (kernel uses bf16 MXU operands, so
    # tolerances are loosened accordingly; flag if bit parity with torch matters).
    xh = jnp.transpose(x, (0, 2, 3, 1))
    xpad = jnp.pad(xh, ((0, 0), (1, 1), (1, 1), (0, 0)))
    cols_r = [xpad[:, kh:kh + H:2, kw:kw + W:2, :] for kh in range(3) for kw in range(3)]
    pat = jnp.stack(cols_r, axis=3).reshape(N * Ho * Wo, 9 * Cin)
    feat_ref = jnp.maximum(pat @ w_bb.reshape(9 * Cin, Cmid) + b_bb, 0.0)
    logit_ref = (feat_ref @ w_cls + b_cls).reshape(N, Ho, Wo, Cnum)
    a_h = jnp.asarray(_bilinear_matrix(H, Ho), jnp.float32)
    a_w = jnp.asarray(_bilinear_matrix(W, Wo), jnp.float32)
    out_ref = jnp.einsum('hi,wj,nijc->nchw', a_h, a_w, logit_ref)
    interm_ref = jnp.transpose(feat_ref.reshape(N, Ho, Wo, Cmid), (0, 3, 1, 2))

    np.testing.assert_allclose(np.asarray(out), np.asarray(out_ref), rtol=2e-2, atol=2e-2)
    np.testing.assert_allclose(np.asarray(interm), np.asarray(interm_ref), rtol=2e-2, atol=2e-2)

    print("KERNEL_OK")
</pallas_src>

<mosaic_0001>
module attributes {stable_mosaic.version = 11 : i64} {
  func.func @_conv_classifier_kernel(%arg0: i32, %arg1: i32, %arg2: memref<1x36x64xbf16, #tpu.memory_space<vmem>>, %arg3: memref<8x36xbf16, #tpu.memory_space<vmem>>, %arg4: memref<8x1xf32, #tpu.memory_space<vmem>>, %arg5: memref<6x8xbf16, #tpu.memory_space<vmem>>, %arg6: memref<6x1xf32, #tpu.memory_space<vmem>>, %arg7: memref<1x8x64xf32, #tpu.memory_space<vmem>>, %arg8: memref<1x6x64xbf16, #tpu.memory_space<vmem>>) attributes {dimension_semantics = [#tpu.dimension_semantics<parallel>, #tpu.dimension_semantics<parallel>], iteration_bounds = array<i64: 2, 1>, scalar_prefetch = 0 : i64, scratch_operands = 0 : i64, tpu.core_type = #tpu.core_type<tc>, window_params = [{transform_indices = @transform_0, window_bounds = array<i64: 1, 36, 64>}, {pipeline_mode = #tpu.pipeline_mode<synchronous>, transform_indices = @transform_1, window_bounds = array<i64: 8, 36>}, {pipeline_mode = #tpu.pipeline_mode<synchronous>, transform_indices = @transform_2, window_bounds = array<i64: 8, 1>}, {pipeline_mode = #tpu.pipeline_mode<synchronous>, transform_indices = @transform_3, window_bounds = array<i64: 6, 8>}, {pipeline_mode = #tpu.pipeline_mode<synchronous>, transform_indices = @transform_4, window_bounds = array<i64: 6, 1>}, {transform_indices = @transform_5, window_bounds = array<i64: 1, 8, 64>}, {transform_indices = @transform_6, window_bounds = array<i64: 1, 6, 64>}]} {
    %c0 = arith.constant 0 : index
    %c0_0 = arith.constant 0 : index
    %c0_1 = arith.constant 0 : index
    %0 = vector.load %arg2[%c0, %c0_0, %c0_1] : memref<1x36x64xbf16, #tpu.memory_space<vmem>>, vector<1x36x64xbf16>
    %1 = vector.shape_cast %0 : vector<1x36x64xbf16> to vector<36x64xbf16>
    %c0_2 = arith.constant 0 : index
    %c0_3 = arith.constant 0 : index
    %2 = vector.load %arg3[%c0_2, %c0_3] : memref<8x36xbf16, #tpu.memory_space<vmem>>, vector<8x36xbf16>
    %cst = arith.constant dense<0.000000e+00> : vector<8x64xf32>
    %3 = tpu.matmul %2, %1, %cst {dimension_numbers = #tpu.dot_dimension_numbers<[1], [0], [0], [1], [0, 0, 1, 1], [], []>} : vector<8x36xbf16>, vector<36x64xbf16>, vector<8x64xf32> -> vector<8x64xf32>
    %c0_4 = arith.constant 0 : index
    %c0_5 = arith.constant 0 : index
    %4 = vector.load %arg4[%c0_4, %c0_5] : memref<8x1xf32, #tpu.memory_space<vmem>>, vector<8x1xf32>
    %5 = vector.broadcast %4 : vector<8x1xf32> to vector<8x64xf32>
    %6 = arith.addf %3, %5 : vector<8x64xf32>
    %cst_6 = arith.constant 0.000000e+00 : f32
    %7 = vector.broadcast %cst_6 : f32 to vector<8x64xf32>
    %8 = arith.maximumf %6, %7 : vector<8x64xf32>
    %c0_7 = arith.constant 0 : index
    %c0_8 = arith.constant 0 : index
    %c0_9 = arith.constant 0 : index
    %9 = vector.load %arg7[%c0_7, %c0_8, %c0_9] : memref<1x8x64xf32, #tpu.memory_space<vmem>>, vector<1x8x64xf32>
    %10 = vector.shape_cast %9 : vector<1x8x64xf32> to vector<8x64xf32>
    %11 = vector.shape_cast %8 : vector<8x64xf32> to vector<1x8x64xf32>
    tpu.vector_store %arg7[%c0_7, %c0_8, %c0_9], %11 {strides = array<i32>} : memref<1x8x64xf32, #tpu.memory_space<vmem>>, vector<1x8x64xf32>,
    %c0_10 = arith.constant 0 : index
    %c0_11 = arith.constant 0 : index
    %12 = vector.load %arg5[%c0_10, %c0_11] : memref<6x8xbf16, #tpu.memory_space<vmem>>, vector<6x8xbf16>
    %13 = arith.truncf %8 : vector<8x64xf32> to vector<8x64xbf16>
    %cst_12 = arith.constant dense<0.000000e+00> : vector<6x64xf32>
    %14 = tpu.matmul %12, %13, %cst_12 {dimension_numbers = #tpu.dot_dimension_numbers<[1], [0], [0], [1], [0, 0, 1, 1], [], []>} : vector<6x8xbf16>, vector<8x64xbf16>, vector<6x64xf32> -> vector<6x64xf32>
    %c0_13 = arith.constant 0 : index
    %c0_14 = arith.constant 0 : index
    %15 = vector.load %arg6[%c0_13, %c0_14] : memref<6x1xf32, #tpu.memory_space<vmem>>, vector<6x1xf32>
    %16 = vector.broadcast %15 : vector<6x1xf32> to vector<6x64xf32>
    %17 = arith.addf %14, %16 : vector<6x64xf32>
    %18 = arith.truncf %17 : vector<6x64xf32> to vector<6x64xbf16>
    %c0_15 = arith.constant 0 : index
    %c0_16 = arith.constant 0 : index
    %c0_17 = arith.constant 0 : index
    %19 = vector.load %arg8[%c0_15, %c0_16, %c0_17] : memref<1x6x64xbf16, #tpu.memory_space<vmem>>, vector<1x6x64xbf16>
    %20 = vector.shape_cast %19 : vector<1x6x64xbf16> to vector<6x64xbf16>
    %21 = vector.shape_cast %18 : vector<6x64xbf16> to vector<1x6x64xbf16>
    tpu.vector_store %arg8[%c0_15, %c0_16, %c0_17], %21 {strides = array<i32>} : memref<1x6x64xbf16, #tpu.memory_space<vmem>>, vector<1x6x64xbf16>,
    return
  }
  func.func @transform_0(%arg0: i32, %arg1: i32) -> (i32, i32, i32) {
    %c0_i32 = arith.constant 0 : i32
    %c0_i32_0 = arith.constant 0 : i32
    return %arg0, %c0_i32, %arg1 : i32, i32, i32
  }
  func.func @transform_1(%arg0: i32, %arg1: i32) -> (i32, i32) {
    %c0_i32 = arith.constant 0 : i32
    %c0_i32_0 = arith.constant 0 : i32
    %c0_i32_1 = arith.constant 0 : i32
    return %c0_i32, %c0_i32_0 : i32, i32
  }
  func.func @transform_2(%arg0: i32, %arg1: i32) -> (i32, i32) {
    %c0_i32 = arith.constant 0 : i32
    %c0_i32_0 = arith.constant 0 : i32
    %c0_i32_1 = arith.constant 0 : i32
    return %c0_i32, %c0_i32_0 : i32, i32
  }
  func.func @transform_3(%arg0: i32, %arg1: i32) -> (i32, i32) {
    %c0_i32 = arith.constant 0 : i32
    %c0_i32_0 = arith.constant 0 : i32
    %c0_i32_1 = arith.constant 0 : i32
    return %c0_i32, %c0_i32_0 : i32, i32
  }
  func.func @transform_4(%arg0: i32, %arg1: i32) -> (i32, i32) {
    %c0_i32 = arith.constant 0 : i32
    %c0_i32_0 = arith.constant 0 : i32
    %c0_i32_1 = arith.constant 0 : i32
    return %c0_i32, %c0_i32_0 : i32, i32
  }
  func.func @transform_5(%arg0: i32, %arg1: i32) -> (i32, i32, i32) {
    %c0_i32 = arith.constant 0 : i32
    %c0_i32_0 = arith.constant 0 : i32
    return %arg0, %c0_i32, %arg1 : i32, i32, i32
  }
  func.func @transform_6(%arg0: i32, %arg1: i32) -> (i32, i32, i32) {
    %c0_i32 = arith.constant 0 : i32
    %c0_i32_0 = arith.constant 0 : i32
    return %arg0, %c0_i32, %arg1 : i32, i32, i32
  }
}

module attributes {stable_mosaic.version = 11 : i64} {
  func.func @_bilinear_kernel(%arg0: i32, %arg1: i32, %arg2: memref<1x48x8xbf16, #tpu.memory_space<vmem>>, %arg3: memref<8x16xbf16, #tpu.memory_space<vmem>>, %arg4: memref<16x8xbf16, #tpu.memory_space<vmem>>, %arg5: memref<1x6x16x16xf32, #tpu.memory_space<vmem>>) attributes {dimension_semantics = [#tpu.dimension_semantics<parallel>, #tpu.dimension_semantics<parallel>], iteration_bounds = array<i64: 2, 1>, scalar_prefetch = 0 : i64, scratch_operands = 0 : i64, tpu.core_type = #tpu.core_type<tc>, window_params = [{transform_indices = @transform_0, window_bounds = array<i64: 1, 48, 8>}, {pipeline_mode = #tpu.pipeline_mode<synchronous>, transform_indices = @transform_1, window_bounds = array<i64: 8, 16>}, {pipeline_mode = #tpu.pipeline_mode<synchronous>, transform_indices = @transform_2, window_bounds = array<i64: 16, 8>}, {transform_indices = @transform_3, window_bounds = array<i64: 1, 6, 16, 16>}]} {
    %c0 = arith.constant 0 : index
    %c0_0 = arith.constant 0 : index
    %c0_1 = arith.constant 0 : index
    %0 = vector.load %arg2[%c0, %c0_0, %c0_1] : memref<1x48x8xbf16, #tpu.memory_space<vmem>>, vector<1x48x8xbf16>
    %1 = vector.shape_cast %0 : vector<1x48x8xbf16> to vector<48x8xbf16>
    %c0_2 = arith.constant 0 : index
    %c0_3 = arith.constant 0 : index
    %2 = vector.load %arg3[%c0_2, %c0_3] : memref<8x16xbf16, #tpu.memory_space<vmem>>, vector<8x16xbf16>
    %cst = arith.constant dense<0.000000e+00> : vector<48x16xf32>
    %3 = tpu.matmul %1, %2, %cst {dimension_numbers = #tpu.dot_dimension_numbers<[1], [0], [0], [1], [0, 0, 1, 1], [], []>} : vector<48x8xbf16>, vector<8x16xbf16>, vector<48x16xf32> -> vector<48x16xf32>
    %4 = vector.extract_strided_slice %3 {offsets = [0, 0], sizes = [8, 16], strides = [1, 1]} : vector<48x16xf32> to vector<8x16xf32>
    %5 = arith.truncf %4 : vector<8x16xf32> to vector<8x16xbf16>
    %c0_4 = arith.constant 0 : index
    %c0_5 = arith.constant 0 : index
    %6 = vector.load %arg4[%c0_4, %c0_5] : memref<16x8xbf16, #tpu.memory_space<vmem>>, vector<16x8xbf16>
    %cst_6 = arith.constant dense<0.000000e+00> : vector<16x16xf32>
    %7 = tpu.matmul %6, %5, %cst_6 {dimension_numbers = #tpu.dot_dimension_numbers<[1], [0], [0], [1], [0, 0, 1, 1], [], []>} : vector<16x8xbf16>, vector<8x16xbf16>, vector<16x16xf32> -> vector<16x16xf32>
    %c0_7 = arith.constant 0 : index
    %c0_8 = arith.constant 0 : index
    %c0_9 = arith.constant 0 : index
    %c0_10 = arith.constant 0 : index
    %8 = vector.load %arg5[%c0_7, %c0_8, %c0_9, %c0_10] : memref<1x6x16x16xf32, #tpu.memory_space<vmem>>, vector<1x1x16x16xf32>
    %9 = vector.shape_cast %8 : vector<1x1x16x16xf32> to vector<16x16xf32>
    %10 = vector.shape_cast %7 : vector<16x16xf32> to vector<1x1x16x16xf32>
    tpu.vector_store %arg5[%c0_7, %c0_8, %c0_9, %c0_10], %10 {strides = array<i32>} : memref<1x6x16x16xf32, #tpu.memory_space<vmem>>, vector<1x1x16x16xf32>,
    %11 = vector.extract_strided_slice %3 {offsets = [8, 0], sizes = [8, 16], strides = [1, 1]} : vector<48x16xf32> to vector<8x16xf32>
    %12 = arith.truncf %11 : vector<8x16xf32> to vector<8x16xbf16>
    %c0_11 = arith.constant 0 : index
    %c0_12 = arith.constant 0 : index
    %13 = vector.load %arg4[%c0_11, %c0_12] : memref<16x8xbf16, #tpu.memory_space<vmem>>, vector<16x8xbf16>
    %cst_13 = arith.constant dense<0.000000e+00> : vector<16x16xf32>
    %14 = tpu.matmul %13, %12, %cst_13 {dimension_numbers = #tpu.dot_dimension_numbers<[1], [0], [0], [1], [0, 0, 1, 1], [], []>} : vector<16x8xbf16>, vector<8x16xbf16>, vector<16x16xf32> -> vector<16x16xf32>
    %c0_14 = arith.constant 0 : index
    %c1 = arith.constant 1 : index
    %c0_15 = arith.constant 0 : index
    %c0_16 = arith.constant 0 : index
    %15 = vector.load %arg5[%c0_14, %c1, %c0_15, %c0_16] : memref<1x6x16x16xf32, #tpu.memory_space<vmem>>, vector<1x1x16x16xf32>
    %16 = vector.shape_cast %15 : vector<1x1x16x16xf32> to vector<16x16xf32>
    %17 = vector.shape_cast %14 : vector<16x16xf32> to vector<1x1x16x16xf32>
    tpu.vector_store %arg5[%c0_14, %c1, %c0_15, %c0_16], %17 {strides = array<i32>} : memref<1x6x16x16xf32, #tpu.memory_space<vmem>>, vector<1x1x16x16xf32>,
    %18 = vector.extract_strided_slice %3 {offsets = [16, 0], sizes = [8, 16], strides = [1, 1]} : vector<48x16xf32> to vector<8x16xf32>
    %19 = arith.truncf %18 : vector<8x16xf32> to vector<8x16xbf16>
    %c0_17 = arith.constant 0 : index
    %c0_18 = arith.constant 0 : index
    %20 = vector.load %arg4[%c0_17, %c0_18] : memref<16x8xbf16, #tpu.memory_space<vmem>>, vector<16x8xbf16>
    %cst_19 = arith.constant dense<0.000000e+00> : vector<16x16xf32>
    %21 = tpu.matmul %20, %19, %cst_19 {dimension_numbers = #tpu.dot_dimension_numbers<[1], [0], [0], [1], [0, 0, 1, 1], [], []>} : vector<16x8xbf16>, vector<8x16xbf16>, vector<16x16xf32> -> vector<16x16xf32>
    %c0_20 = arith.constant 0 : index
    %c2 = arith.constant 2 : index
    %c0_21 = arith.constant 0 : index
    %c0_22 = arith.constant 0 : index
    %22 = vector.load %arg5[%c0_20, %c2, %c0_21, %c0_22] : memref<1x6x16x16xf32, #tpu.memory_space<vmem>>, vector<1x1x16x16xf32>
    %23 = vector.shape_cast %22 : vector<1x1x16x16xf32> to vector<16x16xf32>
    %24 = vector.shape_cast %21 : vector<16x16xf32> to vector<1x1x16x16xf32>
    tpu.vector_store %arg5[%c0_20, %c2, %c0_21, %c0_22], %24 {strides = array<i32>} : memref<1x6x16x16xf32, #tpu.memory_space<vmem>>, vector<1x1x16x16xf32>,
    %25 = vector.extract_strided_slice %3 {offsets = [24, 0], sizes = [8, 16], strides = [1, 1]} : vector<48x16xf32> to vector<8x16xf32>
    %26 = arith.truncf %25 : vector<8x16xf32> to vector<8x16xbf16>
    %c0_23 = arith.constant 0 : index
    %c0_24 = arith.constant 0 : index
    %27 = vector.load %arg4[%c0_23, %c0_24] : memref<16x8xbf16, #tpu.memory_space<vmem>>, vector<16x8xbf16>
    %cst_25 = arith.constant dense<0.000000e+00> : vector<16x16xf32>
    %28 = tpu.matmul %27, %26, %cst_25 {dimension_numbers = #tpu.dot_dimension_numbers<[1], [0], [0], [1], [0, 0, 1, 1], [], []>} : vector<16x8xbf16>, vector<8x16xbf16>, vector<16x16xf32> -> vector<16x16xf32>
    %c0_26 = arith.constant 0 : index
    %c3 = arith.constant 3 : index
    %c0_27 = arith.constant 0 : index
    %c0_28 = arith.constant 0 : index
    %29 = vector.load %arg5[%c0_26, %c3, %c0_27, %c0_28] : memref<1x6x16x16xf32, #tpu.memory_space<vmem>>, vector<1x1x16x16xf32>
    %30 = vector.shape_cast %29 : vector<1x1x16x16xf32> to vector<16x16xf32>
    %31 = vector.shape_cast %28 : vector<16x16xf32> to vector<1x1x16x16xf32>
    tpu.vector_store %arg5[%c0_26, %c3, %c0_27, %c0_28], %31 {strides = array<i32>} : memref<1x6x16x16xf32, #tpu.memory_space<vmem>>, vector<1x1x16x16xf32>,
    %32 = vector.extract_strided_slice %3 {offsets = [32, 0], sizes = [8, 16], strides = [1, 1]} : vector<48x16xf32> to vector<8x16xf32>
    %33 = arith.truncf %32 : vector<8x16xf32> to vector<8x16xbf16>
    %c0_29 = arith.constant 0 : index
    %c0_30 = arith.constant 0 : index
    %34 = vector.load %arg4[%c0_29, %c0_30] : memref<16x8xbf16, #tpu.memory_space<vmem>>, vector<16x8xbf16>
    %cst_31 = arith.constant dense<0.000000e+00> : vector<16x16xf32>
    %35 = tpu.matmul %34, %33, %cst_31 {dimension_numbers = #tpu.dot_dimension_numbers<[1], [0], [0], [1], [0, 0, 1, 1], [], []>} : vector<16x8xbf16>, vector<8x16xbf16>, vector<16x16xf32> -> vector<16x16xf32>
    %c0_32 = arith.constant 0 : index
    %c4 = arith.constant 4 : index
    %c0_33 = arith.constant 0 : index
    %c0_34 = arith.constant 0 : index
    %36 = vector.load %arg5[%c0_32, %c4, %c0_33, %c0_34] : memref<1x6x16x16xf32, #tpu.memory_space<vmem>>, vector<1x1x16x16xf32>
    %37 = vector.shape_cast %36 : vector<1x1x16x16xf32> to vector<16x16xf32>
    %38 = vector.shape_cast %35 : vector<16x16xf32> to vector<1x1x16x16xf32>
    tpu.vector_store %arg5[%c0_32, %c4, %c0_33, %c0_34], %38 {strides = array<i32>} : memref<1x6x16x16xf32, #tpu.memory_space<vmem>>, vector<1x1x16x16xf32>,
    %39 = vector.extract_strided_slice %3 {offsets = [40, 0], sizes = [8, 16], strides = [1, 1]} : vector<48x16xf32> to vector<8x16xf32>
    %40 = arith.truncf %39 : vector<8x16xf32> to vector<8x16xbf16>
    %c0_35 = arith.constant 0 : index
    %c0_36 = arith.constant 0 : index
    %41 = vector.load %arg4[%c0_35, %c0_36] : memref<16x8xbf16, #tpu.memory_space<vmem>>, vector<16x8xbf16>
    %cst_37 = arith.constant dense<0.000000e+00> : vector<16x16xf32>
    %42 = tpu.matmul %41, %40, %cst_37 {dimension_numbers = #tpu.dot_dimension_numbers<[1], [0], [0], [1], [0, 0, 1, 1], [], []>} : vector<16x8xbf16>, vector<8x16xbf16>, vector<16x16xf32> -> vector<16x16xf32>
    %c0_38 = arith.constant 0 : index
    %c5 = arith.constant 5 : index
    %c0_39 = arith.constant 0 : index
    %c0_40 = arith.constant 0 : index
    %43 = vector.load %arg5[%c0_38, %c5, %c0_39, %c0_40] : memref<1x6x16x16xf32, #tpu.memory_space<vmem>>, vector<1x1x16x16xf32>
    %44 = vector.shape_cast %43 : vector<1x1x16x16xf32> to vector<16x16xf32>
    %45 = vector.shape_cast %42 : vector<16x16xf32> to vector<1x1x16x16xf32>
    tpu.vector_store %arg5[%c0_38, %c5, %c0_39, %c0_40], %45 {strides = array<i32>} : memref<1x6x16x16xf32, #tpu.memory_space<vmem>>, vector<1x1x16x16xf32>,
    return
  }
  func.func @transform_0(%arg0: i32, %arg1: i32) -> (i32, i32, i32) {
    %c0_i32 = arith.constant 0 : i32
    %c0_i32_0 = arith.constant 0 : i32
    return %arg0, %arg1, %c0_i32 : i32, i32, i32
  }
  func.func @transform_1(%arg0: i32, %arg1: i32) -> (i32, i32) {
    %c0_i32 = arith.constant 0 : i32
    %c0_i32_0 = arith.constant 0 : i32
    %c0_i32_1 = arith.constant 0 : i32
    return %c0_i32, %c0_i32_0 : i32, i32
  }
  func.func @transform_2(%arg0: i32, %arg1: i32) -> (i32, i32) {
    %c0_i32 = arith.constant 0 : i32
    %c0_i32_0 = arith.constant 0 : i32
    %c0_i32_1 = arith.constant 0 : i32
    return %c0_i32, %c0_i32_0 : i32, i32
  }
  func.func @transform_3(%arg0: i32, %arg1: i32) -> (i32, i32, i32, i32) {
    %c0_i32 = arith.constant 0 : i32
    %c0_i32_0 = arith.constant 0 : i32
    %c0_i32_1 = arith.constant 0 : i32
    return %arg0, %arg1, %c0_i32, %c0_i32_0 : i32, i32, i32, i32
  }
}

</mosaic_0001>

<llo_original>
// kernel: simple_segmentation_forward.2
$region0: #{simple_segmentation_forward.2}
  #allocation0 [shape = 'u32[]', space=smem, size = 0x4, offset = 0x4, fixed_abs, tag = 'smem constant byte address 0x4 - core index']
  #allocation1 [shape = 'u32[144,128]{1,0:T(1,128)}', space=vmem, size = 0x12000, scoped, tag = 'internal scratch']
  %s0 = inlined_call_operand.vmem [shape: bf16[2,36,64], index: 0, kind: input, shape index: {}]
  %s1 = inlined_call_operand.vmem [shape: bf16[8,36], index: 1, kind: input, shape index: {}]
  %s2 = inlined_call_operand.vmem [shape: f32[8,1], index: 2, kind: input, shape index: {}]
  %s3 = inlined_call_operand.vmem [shape: bf16[6,8], index: 3, kind: input, shape index: {}]
  %s4 = inlined_call_operand.vmem [shape: f32[6,1], index: 4, kind: input, shape index: {}]
  %s5 = inlined_call_operand.vmem [shape: f32[2,8,64], index: 5, kind: output, shape index: {0}]
  %s6 = inlined_call_operand.vmem [shape: bf16[2,6,64], index: 6, kind: output, shape index: {1}]
  %7 = xla_tuple %s5, %s6
  %s8 = sld [smem:[#allocation0]]
  $region61: #{simple_segmentation_forward.2} parent=0
    _
  %s10 = ssub.s32 1, %s8
  %s11 = scalar_select 0, %s10, %s8
  loop: start=0, step=1, limit=4
  $region2: #{simple_segmentation_forward.2} parent=0 // loop_pre_header
    _
  $region3: #{simple_segmentation_forward.2} parent=0 // loop_header
    %s13 = sphi 0, %s17
    %p14 = scmp.ge.s32.totalorder %s13, 4
    %s20 = sphi 0, %s32
    %s21 = sphi 0, %s28
    %s22 = sphi 0, %s20
    %s23 = sphi 0, %s21
    %s24 = sphi 0, %s22
    %s25 = sphi 0, %s23
    %s37 = sphi 0, %s39
    %s40 = sphi 0, %s37
    %s41 = sphi 0, %s40
    %s57 = sphi 0, %s41
    %s61 = sphi 0, %s61
    %s63 = sphi 0, %s61
    %s64 = sphi 0, %s63
    %s78 = sphi 0, %s64
    %s82 = sphi 0, %s82
    %s84 = sphi 0, %s82
    %s85 = sphi 0, %s84
    %s99 = sphi 0, %s85
    %s103 = sphi 0, %s103
    %s105 = sphi 0, %s103
    %s106 = sphi 0, %s105
    %s120 = sphi 0, %s106
    %s124 = sphi 0, %s124
    %s126 = sphi 0, %s124
    %s127 = sphi 0, %s126
    %s141 = sphi 0, %s127
    %s149 = sphi 0, %s151
    %s152 = sphi 0, %s149
    %s153 = sphi 0, %s152
    %s169 = sphi 0, %s153
    %s177 = sphi 0, %s179
    %s180 = sphi 0, %s177
    %s181 = sphi 0, %s180
    %s197 = sphi 0, %s181
  $region4: #{simple_segmentation_forward.2} parent=0 // loop_header_branch
    %16 = sbr.rel (%p14) target = $region8
  $region5: #{simple_segmentation_forward.2} parent=0 // loop_body
    %s18 = ssub.s32 %s13, 1
    %s19 = ssub.s32 %s13, 2
    %s26 = sadd.s32 1, %s21
    %p27 = scmp.ge.s32.totalorder %s26, 1
    %s28 = scalar_select %p27, 0, %s26
    %s29 = sadd.s32 1, %s20
    %s30 = scalar_select %p27, %s29, %s20
    %p31 = scmp.ge.s32.totalorder %s30, 2
    %s32 = scalar_select %p31, 0, %s30
    %s33 = ssub.s32 %s20, %s32
    %s34 = ssub.s32 %s21, %s28
    %s35 = sor.u32 %s33, %s34
    %p36 = scmp.eq.s32.totalorder %s35, 0
    %s38 = sadd.s32 %s37, 1
    %s39 = scalar_select %p36, %s37, %s38
    %p42 = pneg %p36
    %p43 = scmp.eq.s32.totalorder %s13, 1
    %p44 = por %p42, %p43
    %p45 = scmp.ne.s32.totalorder %s37, %s40
    %p46 = scmp.eq.s32.totalorder %s13, 0
    %p47 = por %p45, %p46
    %p48 = scmp.ne.s32.totalorder %s37, %s40
    %p49 = scmp.eq.s32.totalorder %s18, 1
    %p50 = por %p48, %p49
    %p51 = scmp.ne.s32.totalorder %s40, %s41
    %p52 = scmp.eq.s32.totalorder %s18, 0
    %p53 = por %p51, %p52
    %p54 = scmp.ne.s32.totalorder %s40, %s41
    %p55 = scmp.eq.s32.totalorder %s19, 1
    %p56 = por %p54, %p55
    %p58 = scmp.ne.s32.totalorder %s41, %s57
    %p59 = scmp.eq.s32.totalorder %s19, 0
    %p60 = por %p58, %p59
    %s62 = sadd.s32 %s61, 1
    %p65 = scmp.eq.s32.totalorder %s13, 1
    %p66 = scmp.ne.s32.totalorder %s61, %s63
    %p67 = scmp.eq.s32.totalorder %s13, 0
    %p68 = por %p66, %p67
    %p69 = scmp.ne.s32.totalorder %s61, %s63
    %p70 = scmp.eq.s32.totalorder %s18, 1
    %p71 = por %p69, %p70
    %p72 = scmp.ne.s32.totalorder %s63, %s64
    %p73 = scmp.eq.s32.totalorder %s18, 0
    %p74 = por %p72, %p73
    %p75 = scmp.ne.s32.totalorder %s63, %s64
    %p76 = scmp.eq.s32.totalorder %s19, 1
    %p77 = por %p75, %p76
    %p79 = scmp.ne.s32.totalorder %s64, %s78
    %p80 = scmp.eq.s32.totalorder %s19, 0
    %p81 = por %p79, %p80
    %s83 = sadd.s32 %s82, 1
    %p86 = scmp.eq.s32.totalorder %s13, 1
    %p87 = scmp.ne.s32.totalorder %s82, %s84
    %p88 = scmp.eq.s32.totalorder %s13, 0
    %p89 = por %p87, %p88
    %p90 = scmp.ne.s32.totalorder %s82, %s84
    %p91 = scmp.eq.s32.totalorder %s18, 1
    %p92 = por %p90, %p91
    %p93 = scmp.ne.s32.totalorder %s84, %s85
    %p94 = scmp.eq.s32.totalorder %s18, 0
    %p95 = por %p93, %p94
    %p96 = scmp.ne.s32.totalorder %s84, %s85
    %p97 = scmp.eq.s32.totalorder %s19, 1
    %p98 = por %p96, %p97
    %p100 = scmp.ne.s32.totalorder %s85, %s99
    %p101 = scmp.eq.s32.totalorder %s19, 0
    %p102 = por %p100, %p101
    %s104 = sadd.s32 %s103, 1
    %p107 = scmp.eq.s32.totalorder %s13, 1
    %p108 = scmp.ne.s32.totalorder %s103, %s105
    %p109 = scmp.eq.s32.totalorder %s13, 0
    %p110 = por %p108, %p109
    %p111 = scmp.ne.s32.totalorder %s103, %s105
    %p112 = scmp.eq.s32.totalorder %s18, 1
    %p113 = por %p111, %p112
    %p114 = scmp.ne.s32.totalorder %s105, %s106
    %p115 = scmp.eq.s32.totalorder %s18, 0
    %p116 = por %p114, %p115
    %p117 = scmp.ne.s32.totalorder %s105, %s106
    %p118 = scmp.eq.s32.totalorder %s19, 1
    %p119 = por %p117, %p118
    %p121 = scmp.ne.s32.totalorder %s106, %s120
    %p122 = scmp.eq.s32.totalorder %s19, 0
    %p123 = por %p121, %p122
    %s125 = sadd.s32 %s124, 1
    %p128 = scmp.eq.s32.totalorder %s13, 1
    %p129 = scmp.ne.s32.totalorder %s124, %s126
    %p130 = scmp.eq.s32.totalorder %s13, 0
    %p131 = por %p129, %p130
    %p132 = scmp.ne.s32.totalorder %s124, %s126
    %p133 = scmp.eq.s32.totalorder %s18, 1
    %p134 = por %p132, %p133
    %p135 = scmp.ne.s32.totalorder %s126, %s127
    %p136 = scmp.eq.s32.totalorder %s18, 0
    %p137 = por %p135, %p136
    %p138 = scmp.ne.s32.totalorder %s126, %s127
    %p139 = scmp.eq.s32.totalorder %s19, 1
    %p140 = por %p138, %p139
    %p142 = scmp.ne.s32.totalorder %s127, %s141
    %p143 = scmp.eq.s32.totalorder %s19, 0
    %p144 = por %p142, %p143
    %s145 = ssub.s32 %s20, %s32
    %s146 = ssub.s32 %s21, %s28
    %s147 = sor.u32 %s145, %s146
    %p148 = scmp.eq.s32.totalorder %s147, 0
    %s150 = sadd.s32 %s149, 1
    %s151 = scalar_select %p148, %s149, %s150
    %p154 = pneg %p148
    %p155 = scmp.eq.s32.totalorder %s13, 1
    %p156 = por %p154, %p155
    %p157 = scmp.ne.s32.totalorder %s149, %s152
    %p158 = scmp.eq.s32.totalorder %s13, 0
    %p159 = por %p157, %p158
    %p160 = scmp.ne.s32.totalorder %s149, %s152
    %p161 = scmp.eq.s32.totalorder %s18, 1
    %p162 = por %p160, %p161
    %p163 = scmp.ne.s32.totalorder %s152, %s153
    %p164 = scmp.eq.s32.totalorder %s18, 0
    %p165 = por %p163, %p164
    %p166 = scmp.ne.s32.totalorder %s152, %s153
    %p167 = scmp.eq.s32.totalorder %s19, 1
    %p168 = por %p166, %p167
    %p170 = scmp.ne.s32.totalorder %s153, %s169
    %p171 = scmp.eq.s32.totalorder %s19, 0
    %p172 = por %p170, %p171
    %s173 = ssub.s32 %s20, %s32
    %s174 = ssub.s32 %s21, %s28
    %s175 = sor.u32 %s173, %s174
    %p176 = scmp.eq.s32.totalorder %s175, 0
    %s178 = sadd.s32 %s177, 1
    %s179 = scalar_select %p176, %s177, %s178
    %p182 = pneg %p176
    %p183 = scmp.eq.s32.totalorder %s13, 1
    %p184 = por %p182, %p183
    %p185 = scmp.ne.s32.totalorder %s177, %s180
    %p186 = scmp.eq.s32.totalorder %s13, 0
    %p187 = por %p185, %p186
    %p188 = scmp.ne.s32.totalorder %s177, %s180
    %p189 = scmp.eq.s32.totalorder %s18, 1
    %p190 = por %p188, %p189
    %p191 = scmp.ne.s32.totalorder %s180, %s181
    %p192 = scmp.eq.s32.totalorder %s18, 0
    %p193 = por %p191, %p192
    %p194 = scmp.ne.s32.totalorder %s180, %s181
    %p195 = scmp.eq.s32.totalorder %s19, 1
    %p196 = por %p194, %p195
    %p198 = scmp.ne.s32.totalorder %s181, %s197
    %p199 = scmp.eq.s32.totalorder %s19, 0
    %p200 = por %p198, %p199
    %p201 = scmp.le.s32.totalorder 1, %s13
    %p202 = scmp.lt.s32.totalorder %s13, 3
    %p203 = pnand %p201, %p202
    %p204 = pneg %p203
    // Predicated region
    $region9: #{simple_segmentation_forward.2} parent=5 // pred_check
      _
    $region10: #{simple_segmentation_forward.2} parent=5 // pred_check_branch
      %206 = sbr.rel (%p203) target = $region12
    $region11: #{simple_segmentation_forward.2} parent=5 // pred_region
      %s207 = ssub.s32 %s13, 1
      // Predicated region
      $region13: #{simple_segmentation_forward.2} parent=11 // pred_check
        %p208 = pneg %p74
      $region14: #{simple_segmentation_forward.2} parent=11 // pred_check_branch
        %210 = sbr.rel (%p208) target = $region16
      $region15: #{simple_segmentation_forward.2} parent=11 // pred_region
        _
      $region16: #{simple_segmentation_forward.2} parent=11 // pred_fallthru
        _
      // Predicated region
      $region17: #{simple_segmentation_forward.2} parent=11 // pred_check
        %p211 = pneg %p95
      $region18: #{simple_segmentation_forward.2} parent=11 // pred_check_branch
        %213 = sbr.rel (%p211) target = $region20
      $region19: #{simple_segmentation_forward.2} parent=11 // pred_region
        _
      $region20: #{simple_segmentation_forward.2} parent=11 // pred_fallthru
        _
      // Predicated region
      $region21: #{simple_segmentation_forward.2} parent=11 // pred_check
        %p214 = pneg %p116
      $region22: #{simple_segmentation_forward.2} parent=11 // pred_check_branch
        %216 = sbr.rel (%p214) target = $region24
      $region23: #{simple_segmentation_forward.2} parent=11 // pred_region
        _
      $region24: #{simple_segmentation_forward.2} parent=11 // pred_fallthru
        _
      // Predicated region
      $region25: #{simple_segmentation_forward.2} parent=11 // pred_check
        %p217 = pneg %p137
      $region26: #{simple_segmentation_forward.2} parent=11 // pred_check_branch
        %219 = sbr.rel (%p217) target = $region28
      $region27: #{simple_segmentation_forward.2} parent=11 // pred_region
        _
      $region28: #{simple_segmentation_forward.2} parent=11 // pred_fallthru
        _
    $region12: #{simple_segmentation_forward.2} parent=5 // pred_fallthru
      _
    %p220 = scmp.lt.s32.totalorder %s13, 2
    // Predicated region
    $region29: #{simple_segmentation_forward.2} parent=5 // pred_check
      %p221 = pneg %p220
    $region30: #{simple_segmentation_forward.2} parent=5 // pred_check_branch
      %223 = sbr.rel (%p221) target = $region32
    $region31: #{simple_segmentation_forward.2} parent=5 // pred_region
      // Predicated region
      $region33: #{simple_segmentation_forward.2} parent=31 // pred_check
        %p224 = pneg %p47
      $region34: #{simple_segmentation_forward.2} parent=31 // pred_check_branch
        %226 = sbr.rel (%p224) target = $region36
      $region35: #{simple_segmentation_forward.2} parent=31 // pred_region
        %p227 = scmp.lt.s32.totalorder %s20, 1
        %s228 = scalar_select %p227, %s20, 1
        %p229 = scmp.lt.s32.totalorder %s21, 0
        %s230 = scalar_select %p229, %s21, 0
        %s231 = smul.addr %s228, 5
        %s232 = sadd.s32 %s230, %s231
        %s233 = smul.addr %s232, 4
        %s234 = scalar_lea.vmem %s0, %s233
      $region36: #{simple_segmentation_forward.2} parent=31 // pred_fallthru
        _
    $region32: #{simple_segmentation_forward.2} parent=5 // pred_fallthru
      _
    %p235 = scmp.le.s32.totalorder 1, %s13
    %p236 = scmp.lt.s32.totalorder %s13, 3
    %p237 = pnand %p235, %p236
    %p238 = pneg %p237
    // Predicated region
    $region37: #{simple_segmentation_forward.2} parent=5 // pred_check
      _
    $region38: #{simple_segmentation_forward.2} parent=5 // pred_check_branch
      %240 = sbr.rel (%p237) target = $region40
    $region39: #{simple_segmentation_forward.2} parent=5 // pred_region
      %s241 = ssub.s32 %s13, 1
      %p242 = scmp.lt.s32.totalorder %s22, 1
      %s243 = scalar_select %p242, %s22, 1
      %p244 = scmp.lt.s32.totalorder %s23, 0
      %s245 = scalar_select %p244, %s23, 0
      %s246 = smul.addr %s243, 5
      %s247 = sadd.s32 %s245, %s246
      %s248 = smul.addr %s247, 4
      %s249 = scalar_lea.vmem %s0, %s248
      %p250 = pneg %p53
      %p251 = pneg %p50
      %p252 = pneg %p74
      %p253 = pneg %p71
      %p254 = pneg %p95
      %p255 = pneg %p92
      %p256 = pneg %p116
      %p257 = pneg %p113
      %p258 = pneg %p137
      %p259 = pneg %p134
      %p260 = pneg %p165
      %p261 = pneg %p162
      %p262 = scmp.lt.s32.totalorder %s22, 1
      %s263 = scalar_select %p262, %s22, 1
      %p264 = scmp.lt.s32.totalorder %s23, 0
      %s265 = scalar_select %p264, %s23, 0
      %s266 = sadd.s32 %s265, %s263
      %s267 = smul.addr %s266, 8
      %s268 = scalar_lea.vmem %s5, %s267
      %p269 = pneg %p193
      %p270 = pneg %p190
      %p271 = scmp.lt.s32.totalorder %s22, 1
      %s272 = scalar_select %p271, %s22, 1
      %p273 = scmp.lt.s32.totalorder %s23, 0
      %s274 = scalar_select %p273, %s23, 0
      %s275 = sadd.s32 %s274, %s272
      %s276 = smul.addr %s275, 4
      %s277 = scalar_lea.vmem %s6, %s276
      %p278 = scmp.lt.s32.totalorder %s22, 1
      %s279 = scalar_select %p278, %s22, 1
      %p280 = scmp.lt.s32.totalorder %s23, 0
      %s281 = scalar_select %p280, %s23, 0
      %s282 = smul.addr %s279, 5
      %s283 = sadd.s32 %s281, %s282
      %s284 = smul.addr %s283, 4
      %s285 = scalar_lea.vmem %s0, %s284
      %p286 = scmp.lt.s32.totalorder %s22, 1
      %s287 = scalar_select %p286, %s22, 1
      %p288 = scmp.lt.s32.totalorder %s23, 0
      %s289 = scalar_select %p288, %s23, 0
      %s290 = sadd.s32 %s289, %s287
      %s291 = smul.addr %s290, 8
      %s292 = scalar_lea.vmem %s5, %s291
      %p293 = scmp.lt.s32.totalorder %s22, 1
      %s294 = scalar_select %p293, %s22, 1
      %p295 = scmp.lt.s32.totalorder %s23, 0
      %s296 = scalar_select %p295, %s23, 0
      %s297 = sadd.s32 %s296, %s294
      %s298 = smul.addr %s297, 4
      %s299 = scalar_lea.vmem %s6, %s298
      %v301 = vld [vmem:[%s285] sm:$0xf]
      %v302 = vld [vmem:[%s285 + $0x4] sm:$0xf]
      %v303 = vld [vmem:[%s285 + $0x8] sm:$0xf]
      %v304 = vld [vmem:[%s285 + $0xc] sm:$0xf]
      %v305 = vld [vmem:[%s285 + $0x10] sm:$0x3]
      %v306 = vld [vmem:[%s1] sm:$0xf]
      %v307 = vld [vmem:[%s2] sm:$0xff]
      %309 = vset.pattern.permute.xlu0 0
      %310 = vperm.xlu0 %309, %v307
      %v311 = vpop.permute.xlu0 %310
      %v318 = vunpack.c.l.b16 %v301
      %v319 = vunpack.c.l.b16 %v302
      %v320 = vunpack.c.l.b16 %v303
      %v321 = vunpack.c.l.b16 %v304
      %v322 = vunpack.c.l.b16 %v305
      %v323 = vpack.c.b16 %v319, %v318
      %v324 = vpack.c.b16 %v321, %v320
      %v325 = vpack.c.b16 %v322, %v322
      %vm328 = vcmask 293888
      %v330 = vsel %vm328, %v306, 0
      %vm332 = vcmask 1041408
      %v334 = vsel %vm332, %v325, 0
      %336 = vmatprep.subr.bf16.mxu0 0
      %337 = vmatpush1.bf16.msra.mxu0 %v323
      %338 = vmatprep.subr.bf16.mxu0 0
      %339 = vmatpush1.bf16.msra.mxu0 %v324
      %340 = vmatprep.subr.bf16.mxu0 0
      %341 = vmatpush1.bf16.msra.mxu0 %v334
      %342 = vmatprep.subr.bf16.mxu0 0
      %343 = vmatpush1.bf16.msra.mxu0 0
      %344 = vmatprep.subr.bf16.mxu0 0
      %345 = vmatpush1.bf16.msra.mxu0 0
      %346 = vmatprep.subr.bf16.mxu0 0
      %347 = vmatpush1.bf16.msra.mxu0 0
      %348 = vmatprep.subr.bf16.mxu0 0
      %349 = vmatpush1.bf16.msra.mxu0 0
      %350 = vmatprep.subr.bf16.mxu0 0
      %351 = vmatpush1.bf16.msra.mxu0 0
      %352 = vmatprep.subr.bf16.mxu0 0
      %353 = vmatpush1.bf16.msra.mxu0 0
      %354 = vmatprep.subr.bf16.mxu0 0
      %355 = vmatpush1.bf16.msra.mxu0 0
      %356 = vmatprep.subr.bf16.mxu0 0
      %357 = vmatpush1.bf16.msra.mxu0 0
      %358 = vmatprep.subr.bf16.mxu0 0
      %359 = vmatpush1.bf16.msra.mxu0 0
      %360 = vmatprep.subr.bf16.mxu0 0
      %361 = vmatpush1.bf16.msra.mxu0 0
      %362 = vmatprep.subr.bf16.mxu0 0
      %363 = vmatpush1.bf16.msra.mxu0 0
      %364 = vmatprep.subr.bf16.mxu0 0
      %365 = vmatpush1.bf16.msra.mxu0 0
      %366 = vmatprep.subr.bf16.mxu0 0
      %367 = vmatpush1.bf16.msra.mxu0 0
      %368 = vmatprep.mubr.bf16.mxu0 0
      %369 = vmatmul.mubr.bf16.gmra.mrb[0].mxu0 %v330
      %v370 = vpop.f32.mrb[0].mxu0
      %v371 = vadd.f32 %v311, %v370
      %v372 = vpop.f32.mrb[0].mxu0
      %v373 = vpop.f32.mrb[0].mxu0
      %v374 = vpop.f32.mrb[0].mxu0
      %375 = vdwg.mxu0
      %v376 = vmax.f32 %v371, 0.0
      %vm377 = vcmask 523264
      %378 = vst.msk [vmem:[%s292] sm:$0xff] %vm377, %v376
      %v379 = vld [vmem:[%s3] sm:$0x7]
      %v380 = vpack.c.bf16 %v376, %v376
      %v381 = vld [vmem:[%s4] sm:$0x3f]
      %383 = vset.pattern.permute.xlu0 0
      %384 = vperm.xlu0 %383, %v381
      %v385 = vpop.permute.xlu0 %384
      %vm387 = vcmask 64512
      %v389 = vsel %vm387, %v379, 0
      %vm391 = vcmask 1043456
      %v393 = vsel %vm391, %v380, 0
      %395 = vmatprep.subr.bf16.mxu0 0
      %396 = vmatpush1.bf16.msra.mxu0 %v393
      %397 = vmatprep.subr.bf16.mxu0 0
      %398 = vmatpush1.bf16.msra.mxu0 0
      %399 = vmatprep.subr.bf16.mxu0 0
      %400 = vmatpush1.bf16.msra.mxu0 0
      %401 = vmatprep.subr.bf16.mxu0 0
      %402 = vmatpush1.bf16.msra.mxu0 0
      %403 = vmatprep.subr.bf16.mxu0 0
      %404 = vmatpush1.bf16.msra.mxu0 0
      %405 = vmatprep.subr.bf16.mxu0 0
      %406 = vmatpush1.bf16.msra.mxu0 0
      %407 = vmatprep.subr.bf16.mxu0 0
      %408 = vmatpush1.bf16.msra.mxu0 0
      %409 = vmatprep.subr.bf16.mxu0 0
      %410 = vmatpush1.bf16.msra.mxu0 0
      %411 = vmatprep.subr.bf16.mxu0 0
      %412 = vmatpush1.bf16.msra.mxu0 0
      %413 = vmatprep.subr.bf16.mxu0 0
      %414 = vmatpush1.bf16.msra.mxu0 0
      %415 = vmatprep.subr.bf16.mxu0 0
      %416 = vmatpush1.bf16.msra.mxu0 0
      %417 = vmatprep.subr.bf16.mxu0 0
      %418 = vmatpush1.bf16.msra.mxu0 0
      %419 = vmatprep.subr.bf16.mxu0 0
      %420 = vmatpush1.bf16.msra.mxu0 0
      %421 = vmatprep.subr.bf16.mxu0 0
      %422 = vmatpush1.bf16.msra.mxu0 0
      %423 = vmatprep.subr.bf16.mxu0 0
      %424 = vmatpush1.bf16.msra.mxu0 0
      %425 = vmatprep.subr.bf16.mxu0 0
      %426 = vmatpush1.bf16.msra.mxu0 0
      %427 = vmatprep.mubr.bf16.mxu0 0
      %428 = vmatmul.mubr.bf16.gmra.mrb[0].mxu0 %v389
      %v429 = vpop.f32.mrb[0].mxu0
      %v430 = vadd.f32 %v385, %v429
      %v431 = vpop.f32.mrb[0].mxu0
      %v432 = vpop.f32.mrb[0].mxu0
      %v433 = vpop.f32.mrb[0].mxu0
      %434 = vdwg.mxu0
      %v435 = vpack.c.bf16 %v430, %v430
      %vm436 = vcmask 518144
      %437 = vst.msk [vmem:[%s299] sm:$0x7] %vm436, %v435
      %p438 = scmp.lt.s32.totalorder %s22, 1
      %s439 = scalar_select %p438, %s22, 1
      %p440 = scmp.lt.s32.totalorder %s23, 0
      %s441 = scalar_select %p440, %s23, 0
      %s442 = sadd.s32 %s441, %s439
      %s443 = smul.addr %s442, 8
      %s444 = scalar_lea.vmem %s5, %s443
      %p445 = scmp.lt.s32.totalorder %s22, 1
      %s446 = scalar_select %p445, %s22, 1
      %p447 = scmp.lt.s32.totalorder %s23, 0
      %s448 = scalar_select %p447, %s23, 0
      %s449 = sadd.s32 %s448, %s446
      %s450 = smul.addr %s449, 4
      %s451 = scalar_lea.vmem %s6, %s450
      // Predicated region
      $region41: #{simple_segmentation_forward.2} parent=39 // pred_check
        %p452 = pneg %p162
      $region42: #{simple_segmentation_forward.2} parent=39 // pred_check_branch
        %454 = sbr.rel (%p452) target = $region44
      $region43: #{simple_segmentation_forward.2} parent=39 // pred_region
        _
      $region44: #{simple_segmentation_forward.2} parent=39 // pred_fallthru
        _
      // Predicated region
      $region45: #{simple_segmentation_forward.2} parent=39 // pred_check
        %p455 = pneg %p190
      $region46: #{simple_segmentation_forward.2} parent=39 // pred_check_branch
        %457 = sbr.rel (%p455) target = $region48
      $region47: #{simple_segmentation_forward.2} parent=39 // pred_region
        _
      $region48: #{simple_segmentation_forward.2} parent=39 // pred_fallthru
        _
    $region40: #{simple_segmentation_forward.2} parent=5 // pred_fallthru
      _
    %p458 = scmp.le.s32.totalorder 2, %s13
    // Predicated region
    $region49: #{simple_segmentation_forward.2} parent=5 // pred_check
      %p459 = pneg %p458
    $region50: #{simple_segmentation_forward.2} parent=5 // pred_check_branch
      %461 = sbr.rel (%p459) target = $region52
    $region51: #{simple_segmentation_forward.2} parent=5 // pred_region
      %s462 = ssub.s32 %s13, 2
      // Predicated region
      $region53: #{simple_segmentation_forward.2} parent=51 // pred_check
        %p463 = pneg %p168
      $region54: #{simple_segmentation_forward.2} parent=51 // pred_check_branch
        %465 = sbr.rel (%p463) target = $region56
      $region55: #{simple_segmentation_forward.2} parent=51 // pred_region
        %p466 = scmp.lt.s32.totalorder %s24, 1
        %s467 = scalar_select %p466, %s24, 1
        %p468 = scmp.lt.s32.totalorder %s25, 0
        %s469 = scalar_select %p468, %s25, 0
        %s470 = sadd.s32 %s469, %s467
        %s471 = smul.addr %s470, 8
        %s472 = scalar_lea.vmem %s5, %s471
      $region56: #{simple_segmentation_forward.2} parent=51 // pred_fallthru
        _
      // Predicated region
      $region57: #{simple_segmentation_forward.2} parent=51 // pred_check
        %p473 = pneg %p196
      $region58: #{simple_segmentation_forward.2} parent=51 // pred_check_branch
        %475 = sbr.rel (%p473) target = $region60
      $region59: #{simple_segmentation_forward.2} parent=51 // pred_region
        %p476 = scmp.lt.s32.totalorder %s24, 1
        %s477 = scalar_select %p476, %s24, 1
        %p478 = scmp.lt.s32.totalorder %s25, 0
        %s479 = scalar_select %p478, %s25, 0
        %s480 = sadd.s32 %s479, %s477
        %s481 = smul.addr %s480, 4
        %s482 = scalar_lea.vmem %s6, %s481
      $region60: #{simple_segmentation_forward.2} parent=51 // pred_fallthru
        _
    $region52: #{simple_segmentation_forward.2} parent=5 // pred_fallthru
      _
  $region6: #{simple_segmentation_forward.2} parent=0 // loop_footer
    %s17 = sadd.s32 1, %s13
  $region7: #{simple_segmentation_forward.2} parent=0 // loop_footer_branch
    %12 = sbr.rel target = $region3
  $region8: #{simple_segmentation_forward.2} parent=0 // loop_exit
    _

// kernel: simple_segmentation_forward.3
$region0: #{simple_segmentation_forward.3}
  #allocation0 [shape = 'u32[]', space=smem, size = 0x4, offset = 0x4, fixed_abs, tag = 'smem constant byte address 0x4 - core index']
  #allocation1 [shape = 'u32[144,128]{1,0:T(1,128)}', space=vmem, size = 0x12000, scoped, tag = 'internal scratch']
  %s0 = inlined_call_operand.vmem [shape: bf16[2,48,8], index: 0, kind: input, shape index: {}]
  %s1 = inlined_call_operand.vmem [shape: bf16[8,16], index: 1, kind: input, shape index: {}]
  %s2 = inlined_call_operand.vmem [shape: bf16[16,8], index: 2, kind: input, shape index: {}]
  %s3 = inlined_call_operand.hbm [shape: f32[2,6,16,16], index: 3, kind: output, shape index: {}]
  %s4 = sld [smem:[#allocation0]]
  $region45: #{simple_segmentation_forward.3} parent=0
    _
  %s6 = ssub.s32 1, %s4
  %s7 = scalar_select 0, %s6, %s4
  $region1: #{simple_segmentation_forward.3} parent=0
    #allocation2 [shape = 'u8[98304]{0}', space=vmem, size = 0x18000, scoped, tag = 'output window, operand 0']
    #allocation3 [shape = 's32[2]{0}', space=sflag, size = 0x8, scoped, tag = 'scoped memory for simple_segmentation_forward.3']
    %8 = vsyncpa [#allocation3], 0
    %s9 = scalar_lea.sflag [#allocation3], 1
    %10 = vsyncpa %s9, 0
    loop: start=0, step=1, limit=4
    $region2: #{simple_segmentation_forward.3} parent=1 // loop_pre_header
      _
    $region3: #{simple_segmentation_forward.3} parent=1 // loop_header
      %s12 = sphi 0, %s16
      %p13 = scmp.ge.s32.totalorder %s12, 4
      %s19 = sphi 0, %s31
      %s20 = sphi 0, %s27
      %s21 = sphi 0, %s19
      %s22 = sphi 0, %s20
      %s23 = sphi 0, %s21
      %s24 = sphi 0, %s22
      %s36 = sphi 0, %s38
      %s39 = sphi 0, %s36
      %s40 = sphi 0, %s39
      %s56 = sphi 0, %s40
      %s60 = sphi 0, %s60
      %s62 = sphi 0, %s60
      %s63 = sphi 0, %s62
      %s77 = sphi 0, %s63
      %s81 = sphi 0, %s81
      %s83 = sphi 0, %s81
      %s84 = sphi 0, %s83
      %s98 = sphi 0, %s84
      %s106 = sphi 0, %s108
      %s109 = sphi 0, %s106
      %s110 = sphi 0, %s109
      %s126 = sphi 0, %s110
    $region4: #{simple_segmentation_forward.3} parent=1 // loop_header_branch
      %15 = sbr.rel (%p13) target = $region8
    $region5: #{simple_segmentation_forward.3} parent=1 // loop_body
      %s17 = ssub.s32 %s12, 1
      %s18 = ssub.s32 %s12, 2
      %s25 = sadd.s32 1, %s20
      %p26 = scmp.ge.s32.totalorder %s25, 1
      %s27 = scalar_select %p26, 0, %s25
      %s28 = sadd.s32 1, %s19
      %s29 = scalar_select %p26, %s28, %s19
      %p30 = scmp.ge.s32.totalorder %s29, 2
      %s31 = scalar_select %p30, 0, %s29
      %s32 = ssub.s32 %s19, %s31
      %s33 = ssub.s32 %s20, %s27
      %s34 = sor.u32 %s32, %s33
      %p35 = scmp.eq.s32.totalorder %s34, 0
      %s37 = sadd.s32 %s36, 1
      %s38 = scalar_select %p35, %s36, %s37
      %p41 = pneg %p35
      %p42 = scmp.eq.s32.totalorder %s12, 1
      %p43 = por %p41, %p42
      %p44 = scmp.ne.s32.totalorder %s36, %s39
      %p45 = scmp.eq.s32.totalorder %s12, 0
      %p46 = por %p44, %p45
      %p47 = scmp.ne.s32.totalorder %s36, %s39
      %p48 = scmp.eq.s32.totalorder %s17, 1
      %p49 = por %p47, %p48
      %p50 = scmp.ne.s32.totalorder %s39, %s40
      %p51 = scmp.eq.s32.totalorder %s17, 0
      %p52 = por %p50, %p51
      %p53 = scmp.ne.s32.totalorder %s39, %s40
      %p54 = scmp.eq.s32.totalorder %s18, 1
      %p55 = por %p53, %p54
      %p57 = scmp.ne.s32.totalorder %s40, %s56
      %p58 = scmp.eq.s32.totalorder %s18, 0
      %p59 = por %p57, %p58
      %s61 = sadd.s32 %s60, 1
      %p64 = scmp.eq.s32.totalorder %s12, 1
      %p65 = scmp.ne.s32.totalorder %s60, %s62
      %p66 = scmp.eq.s32.totalorder %s12, 0
      %p67 = por %p65, %p66
      %p68 = scmp.ne.s32.totalorder %s60, %s62
      %p69 = scmp.eq.s32.totalorder %s17, 1
      %p70 = por %p68, %p69
      %p71 = scmp.ne.s32.totalorder %s62, %s63
      %p72 = scmp.eq.s32.totalorder %s17, 0
      %p73 = por %p71, %p72
      %p74 = scmp.ne.s32.totalorder %s62, %s63
      %p75 = scmp.eq.s32.totalorder %s18, 1
      %p76 = por %p74, %p75
      %p78 = scmp.ne.s32.totalorder %s63, %s77
      %p79 = scmp.eq.s32.totalorder %s18, 0
      %p80 = por %p78, %p79
      %s82 = sadd.s32 %s81, 1
      %p85 = scmp.eq.s32.totalorder %s12, 1
      %p86 = scmp.ne.s32.totalorder %s81, %s83
      %p87 = scmp.eq.s32.totalorder %s12, 0
      %p88 = por %p86, %p87
      %p89 = scmp.ne.s32.totalorder %s81, %s83
      %p90 = scmp.eq.s32.totalorder %s17, 1
      %p91 = por %p89, %p90
      %p92 = scmp.ne.s32.totalorder %s83, %s84
      %p93 = scmp.eq.s32.totalorder %s17, 0
      %p94 = por %p92, %p93
      %p95 = scmp.ne.s32.totalorder %s83, %s84
      %p96 = scmp.eq.s32.totalorder %s18, 1
      %p97 = por %p95, %p96
      %p99 = scmp.ne.s32.totalorder %s84, %s98
      %p100 = scmp.eq.s32.totalorder %s18, 0
      %p101 = por %p99, %p100
      %s102 = ssub.s32 %s19, %s31
      %s103 = ssub.s32 %s20, %s27
      %s104 = sor.u32 %s102, %s103
      %p105 = scmp.eq.s32.totalorder %s104, 0
      %s107 = sadd.s32 %s106, 1
      %s108 = scalar_select %p105, %s106, %s107
      %p111 = pneg %p105
      %p112 = scmp.eq.s32.totalorder %s12, 1
      %p113 = por %p111, %p112
      %p114 = scmp.ne.s32.totalorder %s106, %s109
      %p115 = scmp.eq.s32.totalorder %s12, 0
      %p116 = por %p114, %p115
      %p117 = scmp.ne.s32.totalorder %s106, %s109
      %p118 = scmp.eq.s32.totalorder %s17, 1
      %p119 = por %p117, %p118
      %p120 = scmp.ne.s32.totalorder %s109, %s110
      %p121 = scmp.eq.s32.totalorder %s17, 0
      %p122 = por %p120, %p121
      %p123 = scmp.ne.s32.totalorder %s109, %s110
      %p124 = scmp.eq.s32.totalorder %s18, 1
      %p125 = por %p123, %p124
      %p127 = scmp.ne.s32.totalorder %s110, %s126
      %p128 = scmp.eq.s32.totalorder %s18, 0
      %p129 = por %p127, %p128
      %p130 = scmp.le.s32.totalorder 1, %s12
      %p131 = scmp.lt.s32.totalorder %s12, 3
      %p132 = pnand %p130, %p131
      %p133 = pneg %p132
      // Predicated region
      $region9: #{simple_segmentation_forward.3} parent=5 // pred_check
        _
      $region10: #{simple_segmentation_forward.3} parent=5 // pred_check_branch
        %135 = sbr.rel (%p132) target = $region12
      $region11: #{simple_segmentation_forward.3} parent=5 // pred_region
        %s136 = ssub.s32 %s12, 1
        // Predicated region
        $region13: #{simple_segmentation_forward.3} parent=11 // pred_check
          %p137 = pneg %p73
        $region14: #{simple_segmentation_forward.3} parent=11 // pred_check_branch
          %139 = sbr.rel (%p137) target = $region16
        $region15: #{simple_segmentation_forward.3} parent=11 // pred_region
          _
        $region16: #{simple_segmentation_forward.3} parent=11 // pred_fallthru
          _
        // Predicated region
        $region17: #{simple_segmentation_forward.3} parent=11 // pred_check
          %p140 = pneg %p94
        $region18: #{simple_segmentation_forward.3} parent=11 // pred_check_branch
          %142 = sbr.rel (%p140) target = $region20
        $region19: #{simple_segmentation_forward.3} parent=11 // pred_region
          _
        $region20: #{simple_segmentation_forward.3} parent=11 // pred_fallthru
          _
      $region12: #{simple_segmentation_forward.3} parent=5 // pred_fallthru
        _
      %p143 = scmp.lt.s32.totalorder %s12, 2
      // Predicated region
      $region21: #{simple_segmentation_forward.3} parent=5 // pred_check
        %p144 = pneg %p143
      $region22: #{simple_segmentation_forward.3} parent=5 // pred_check_branch
        %146 = sbr.rel (%p144) target = $region24
      $region23: #{simple_segmentation_forward.3} parent=5 // pred_region
        // Predicated region
        $region25: #{simple_segmentation_forward.3} parent=23 // pred_check
          %p147 = pneg %p46
        $region26: #{simple_segmentation_forward.3} parent=23 // pred_check_branch
          %149 = sbr.rel (%p147) target = $region28
        $region27: #{simple_segmentation_forward.3} parent=23 // pred_region
          %s150 = smul.u32 6, %s20
          %p151 = scmp.lt.s32.totalorder %s19, 1
          %s152 = scalar_select %p151, %s19, 1
          %p153 = scmp.lt.s32.totalorder %s150, 5
          %s154 = scalar_select %p153, %s150, 5
          %s155 = smul.addr %s152, 6
          %s156 = sadd.s32 %s154, %s155
          %s157 = smul.addr %s156, 4
          %s158 = scalar_lea.vmem %s0, %s157
          %s159 = smul.u32 6, %s20
        $region28: #{simple_segmentation_forward.3} parent=23 // pred_fallthru
          _
      $region24: #{simple_segmentation_forward.3} parent=5 // pred_fallthru
        _
      %p160 = scmp.le.s32.totalorder 1, %s12
      %p161 = scmp.lt.s32.totalorder %s12, 3
      %p162 = pnand %p160, %p161
      %p163 = pneg %p162
      // Predicated region
      $region29: #{simple_segmentation_forward.3} parent=5 // pred_check
        _
      $region30: #{simple_segmentation_forward.3} parent=5 // pred_check_branch
        %165 = sbr.rel (%p162) target = $region32
      $region31: #{simple_segmentation_forward.3} parent=5 // pred_region
        %s166 = ssub.s32 %s12, 1
        %s167 = smul.u32 6, %s22
        %p168 = scmp.lt.s32.totalorder %s21, 1
        %s169 = scalar_select %p168, %s21, 1
        %p170 = scmp.lt.s32.totalorder %s167, 5
        %s171 = scalar_select %p170, %s167, 5
        %s172 = smul.addr %s169, 6
        %s173 = sadd.s32 %s171, %s172
        %s174 = smul.addr %s173, 4
        %s175 = scalar_lea.vmem %s0, %s174
        %p176 = pneg %p52
        %p177 = pneg %p49
        %p178 = pneg %p73
        %p179 = pneg %p70
        %p180 = pneg %p94
        %p181 = pneg %p91
        %p182 = pneg %p122
        %p183 = pneg %p119
        %s184 = sand.u32 %s109, 1
        %s185 = scalar_lea.sflag [#allocation3], %s184
        %s186 = sand.u32 %s109, 1
        %s187 = smul.addr %s186, 96
        %s188 = scalar_lea.vmem [#allocation2], %s187
        %s189 = smul.u32 6, %s22
        %p190 = scmp.lt.s32.totalorder %s21, 1
        %s191 = scalar_select %p190, %s21, 1
        %p192 = scmp.lt.s32.totalorder %s189, 5
        %s193 = scalar_select %p192, %s189, 5
        %s194 = smul.addr %s191, 6
        %s195 = sadd.s32 %s193, %s194
        %s196 = smul.addr %s195, 4
        %s197 = scalar_lea.vmem %s0, %s196
        %s198 = smul.u32 6, %s22
        %s199 = smul.u32 6, %s22
        %v201 = vld [vmem:[%s197] sm:$0xf]
        %v202 = vld [vmem:[%s197 + $0x4] sm:$0xf]
        %v203 = vld [vmem:[%s197 + $0x8] sm:$0xf]
        %v204 = vld [vmem:[%s197 + $0xc] sm:$0xf]
        %v205 = vld [vmem:[%s197 + $0x10] sm:$0xf]
        %v206 = vld [vmem:[%s197 + $0x14] sm:$0xf]
        %v207 = vld [vmem:[%s1] sm:$0xf]
        %v214 = vunpack.c.l.b16 %v201
        %v215 = vunpack.c.l.b16 %v202
        %v216 = vunpack.c.l.b16 %v203
        %v217 = vunpack.c.l.b16 %v204
        %v218 = vunpack.c.l.b16 %v205
        %v219 = vunpack.c.l.b16 %v206
        %v220 = vpack.c.b16 %v215, %v214
        %v221 = vpack.c.b16 %v217, %v216
        %v222 = vpack.c.b16 %v219, %v218
        %vm223 = vcmask 64512
        %v225 = vsel %vm223, %v220, 0
        %v228 = vsel %vm223, %v221, 0
        %v231 = vsel %vm223, %v222, 0
        %vm233 = vcmask 1043456
        %v235 = vsel %vm233, %v207, 0
        %237 = vmatprep.subr.bf16.mxu0 0
        %238 = vmatpush1.bf16.msra.mxu0 %v235
        %239 = vmatprep.subr.bf16.mxu0 0
        %240 = vmatpush1.bf16.msra.mxu0 0
        %241 = vmatprep.subr.bf16.mxu0 0
        %242 = vmatpush1.bf16.msra.mxu0 0
        %243 = vmatprep.subr.bf16.mxu0 0
        %244 = vmatpush1.bf16.msra.mxu0 0
        %245 = vmatprep.subr.bf16.mxu0 0
        %246 = vmatpush1.bf16.msra.mxu0 0
        %247 = vmatprep.subr.bf16.mxu0 0
        %248 = vmatpush1.bf16.msra.mxu0 0
        %249 = vmatprep.subr.bf16.mxu0 0
        %250 = vmatpush1.bf16.msra.mxu0 0
        %251 = vmatprep.subr.bf16.mxu0 0
        %252 = vmatpush1.bf16.msra.mxu0 0
        %253 = vmatprep.subr.bf16.mxu0 0
        %254 = vmatpush1.bf16.msra.mxu0 0
        %255 = vmatprep.subr.bf16.mxu0 0
        %256 = vmatpush1.bf16.msra.mxu0 0
        %257 = vmatprep.subr.bf16.mxu0 0
        %258 = vmatpush1.bf16.msra.mxu0 0
        %259 = vmatprep.subr.bf16.mxu0 0
        %260 = vmatpush1.bf16.msra.mxu0 0
        %261 = vmatprep.subr.bf16.mxu0 0
        %262 = vmatpush1.bf16.msra.mxu0 0
        %263 = vmatprep.subr.bf16.mxu0 0
        %264 = vmatpush1.bf16.msra.mxu0 0
        %265 = vmatprep.subr.bf16.mxu0 0
        %266 = vmatpush1.bf16.msra.mxu0 0
        %267 = vmatprep.subr.bf16.mxu0 0
        %268 = vmatpush1.bf16.msra.mxu0 0
        %269 = vmatprep.mubr.bf16.mxu0 0
        %270 = vmatmul.mubr.bf16.gmra.mrb[0].mxu0 %v225
        %v271 = vpop.f32.mrb[0].mxu0
        %v272 = vadd.f32 0.0, %v271
        %v273 = vpop.f32.mrb[0].mxu0
        %v274 = vpop.f32.mrb[0].mxu0
        %v275 = vadd.f32 0.0, %v274
        %v276 = vpop.f32.mrb[0].mxu0
        %277 = vmatprep.mubr.bf16.mxu0 0
        %278 = vmatmul.mubr.bf16.gmra.mrb[0].mxu0 %v228
        %v279 = vpop.f32.mrb[0].mxu0
        %v280 = vadd.f32 0.0, %v279
        %v281 = vpop.f32.mrb[0].mxu0
        %v282 = vpop.f32.mrb[0].mxu0
        %v283 = vadd.f32 0.0, %v282
        %v284 = vpop.f32.mrb[0].mxu0
        %285 = vmatprep.mubr.bf16.mxu0 0
        %286 = vmatmul.mubr.bf16.gmra.mrb[0].mxu0 %v231
        %v287 = vpop.f32.mrb[0].mxu0
        %v288 = vadd.f32 0.0, %v287
        %v289 = vpop.f32.mrb[0].mxu0
        %v290 = vpop.f32.mrb[0].mxu0
        %v291 = vadd.f32 0.0, %v290
        %v292 = vpop.f32.mrb[0].mxu0
        %293 = vdwg.mxu0
        %v294 = vpack.c.bf16 %v272, %v272
        %v295 = vld [vmem:[%s2] sm:$0xf]
        %v296 = vld [vmem:[%s2 + $0x4] sm:$0xf]
        %v299 = vunpack.c.l.b16 %v295
        %v300 = vunpack.c.l.b16 %v296
        %v301 = vpack.c.b16 %v300, %v299
        %v303 = vsel %vm223, %v301, 0
        %v306 = vsel %vm233, %v294, 0
        %308 = vmatprep.subr.bf16.mxu0 0
        %309 = vmatpush1.bf16.msra.mxu0 %v306
        %310 = vmatprep.subr.bf16.mxu0 0
        %311 = vmatpush1.bf16.msra.mxu0 0
        %312 = vmatprep.subr.bf16.mxu0 0
        %313 = vmatpush1.bf16.msra.mxu0 0
        %314 = vmatprep.subr.bf16.mxu0 0
        %315 = vmatpush1.bf16.msra.mxu0 0
        %316 = vmatprep.subr.bf16.mxu0 0
        %317 = vmatpush1.bf16.msra.mxu0 0
        %318 = vmatprep.subr.bf16.mxu0 0
        %319 = vmatpush1.bf16.msra.mxu0 0
        %320 = vmatprep.subr.bf16.mxu0 0
        %321 = vmatpush1.bf16.msra.mxu0 0
        %322 = vmatprep.subr.bf16.mxu0 0
        %323 = vmatpush1.bf16.msra.mxu0 0
        %324 = vmatprep.subr.bf16.mxu0 0
        %325 = vmatpush1.bf16.msra.mxu0 0
        %326 = vmatprep.subr.bf16.mxu0 0
        %327 = vmatpush1.bf16.msra.mxu0 0
        %328 = vmatprep.subr.bf16.mxu0 0
        %329 = vmatpush1.bf16.msra.mxu0 0
        %330 = vmatprep.subr.bf16.mxu0 0
        %331 = vmatpush1.bf16.msra.mxu0 0
        %332 = vmatprep.subr.bf16.mxu0 0
        %333 = vmatpush1.bf16.msra.mxu0 0
        %334 = vmatprep.subr.bf16.mxu0 0
        %335 = vmatpush1.bf16.msra.mxu0 0
        %336 = vmatprep.subr.bf16.mxu0 0
        %337 = vmatpush1.bf16.msra.mxu0 0
        %338 = vmatprep.subr.bf16.mxu0 0
        %339 = vmatpush1.bf16.msra.mxu0 0
        %340 = vmatprep.mubr.bf16.mxu0 0
        %341 = vmatmul.mubr.bf16.gmra.mrb[0].mxu0 %v303
        %v342 = vpop.f32.mrb[0].mxu0
        %v343 = vadd.f32 0.0, %v342
        %v344 = vpop.f32.mrb[0].mxu0
        %v345 = vpop.f32.mrb[0].mxu0
        %v346 = vadd.f32 0.0, %v345
        %v347 = vpop.f32.mrb[0].mxu0
        %348 = vdwg.mxu0
        %vm349 = vcmask 130048
        %350 = vst.msk [vmem:[%s188] sm:$0xff] %vm349, %v343
        %351 = vst.msk [vmem:[%s188 + $0x8] sm:$0xff] %vm349, %v346
        %v352 = vpack.c.bf16 %v275, %v275
        %v353 = vld [vmem:[%s2] sm:$0xf]
        %v354 = vld [vmem:[%s2 + $0x4] sm:$0xf]
        %v357 = vunpack.c.l.b16 %v353
        %v358 = vunpack.c.l.b16 %v354
        %v359 = vpack.c.b16 %v358, %v357
        %v361 = vsel %vm223, %v359, 0
        %v364 = vsel %vm233, %v352, 0
        %366 = vmatprep.subr.bf16.mxu0 0
        %367 = vmatpush1.bf16.msra.mxu0 %v364
        %368 = vmatprep.subr.bf16.mxu0 0
        %369 = vmatpush1.bf16.msra.mxu0 0
        %370 = vmatprep.subr.bf16.mxu0 0
        %371 = vmatpush1.bf16.msra.mxu0 0
        %372 = vmatprep.subr.bf16.mxu0 0
        %373 = vmatpush1.bf16.msra.mxu0 0
        %374 = vmatprep.subr.bf16.mxu0 0
        %375 = vmatpush1.bf16.msra.mxu0 0
        %376 = vmatprep.subr.bf16.mxu0 0
        %377 = vmatpush1.bf16.msra.mxu0 0
        %378 = vmatprep.subr.bf16.mxu0 0
        %379 = vmatpush1.bf16.msra.mxu0 0
        %380 = vmatprep.subr.bf16.mxu0 0
        %381 = vmatpush1.bf16.msra.mxu0 0
        %382 = vmatprep.subr.bf16.mxu0 0
        %383 = vmatpush1.bf16.msra.mxu0 0
        %384 = vmatprep.subr.bf16.mxu0 0
        %385 = vmatpush1.bf16.msra.mxu0 0
        %386 = vmatprep.subr.bf16.mxu0 0
        %387 = vmatpush1.bf16.msra.mxu0 0
        %388 = vmatprep.subr.bf16.mxu0 0
        %389 = vmatpush1.bf16.msra.mxu0 0
        %390 = vmatprep.subr.bf16.mxu0 0
        %391 = vmatpush1.bf16.msra.mxu0 0
        %392 = vmatprep.subr.bf16.mxu0 0
        %393 = vmatpush1.bf16.msra.mxu0 0
        %394 = vmatprep.subr.bf16.mxu0 0
        %395 = vmatpush1.bf16.msra.mxu0 0
        %396 = vmatprep.subr.bf16.mxu0 0
        %397 = vmatpush1.bf16.msra.mxu0 0
        %398 = vmatprep.mubr.bf16.mxu0 0
        %399 = vmatmul.mubr.bf16.gmra.mrb[0].mxu0 %v361
        %v400 = vpop.f32.mrb[0].mxu0
        %v401 = vadd.f32 0.0, %v400
        %v402 = vpop.f32.mrb[0].mxu0
        %v403 = vpop.f32.mrb[0].mxu0
        %v404 = vadd.f32 0.0, %v403
        %v405 = vpop.f32.mrb[0].mxu0
        %406 = vdwg.mxu0
        %s407 = scalar_lea.vmem %s188, 16 [#allocation2]
        %408 = vst.msk [vmem:[%s407] sm:$0xff] %vm349, %v401
        %409 = vst.msk [vmem:[%s407 + $0x8] sm:$0xff] %vm349, %v404
        %v410 = vpack.c.bf16 %v280, %v280
        %v411 = vld [vmem:[%s2] sm:$0xf]
        %v412 = vld [vmem:[%s2 + $0x4] sm:$0xf]
        %v415 = vunpack.c.l.b16 %v411
        %v416 = vunpack.c.l.b16 %v412
        %v417 = vpack.c.b16 %v416, %v415
        %v419 = vsel %vm223, %v417, 0
        %v422 = vsel %vm233, %v410, 0
        %424 = vmatprep.subr.bf16.mxu0 0
        %425 = vmatpush1.bf16.msra.mxu0 %v422
        %426 = vmatprep.subr.bf16.mxu0 0
        %427 = vmatpush1.bf16.msra.mxu0 0
        %428 = vmatprep.subr.bf16.mxu0 0
        %429 = vmatpush1.bf16.msra.mxu0 0
        %430 = vmatprep.subr.bf16.mxu0 0
        %431 = vmatpush1.bf16.msra.mxu0 0
        %432 = vmatprep.subr.bf16.mxu0 0
        %433 = vmatpush1.bf16.msra.mxu0 0
        %434 = vmatprep.subr.bf16.mxu0 0
        %435 = vmatpush1.bf16.msra.mxu0 0
        %436 = vmatprep.subr.bf16.mxu0 0
        %437 = vmatpush1.bf16.msra.mxu0 0
        %438 = vmatprep.subr.bf16.mxu0 0
        %439 = vmatpush1.bf16.msra.mxu0 0
        %440 = vmatprep.subr.bf16.mxu0 0
        %441 = vmatpush1.bf16.msra.mxu0 0
        %442 = vmatprep.subr.bf16.mxu0 0
        %443 = vmatpush1.bf16.msra.mxu0 0
        %444 = vmatprep.subr.bf16.mxu0 0
        %445 = vmatpush1.bf16.msra.mxu0 0
        %446 = vmatprep.subr.bf16.mxu0 0
        %447 = vmatpush1.bf16.msra.mxu0 0
        %448 = vmatprep.subr.bf16.mxu0 0
        %449 = vmatpush1.bf16.msra.mxu0 0
        %450 = vmatprep.subr.bf16.mxu0 0
        %451 = vmatpush1.bf16.msra.mxu0 0
        %452 = vmatprep.subr.bf16.mxu0 0
        %453 = vmatpush1.bf16.msra.mxu0 0
        %454 = vmatprep.subr.bf16.mxu0 0
        %455 = vmatpush1.bf16.msra.mxu0 0
        %456 = vmatprep.mubr.bf16.mxu0 0
        %457 = vmatmul.mubr.bf16.gmra.mrb[0].mxu0 %v419
        %v458 = vpop.f32.mrb[0].mxu0
        %v459 = vadd.f32 0.0, %v458
        %v460 = vpop.f32.mrb[0].mxu0
        %v461 = vpop.f32.mrb[0].mxu0
        %v462 = vadd.f32 0.0, %v461
        %v463 = vpop.f32.mrb[0].mxu0
        %464 = vdwg.mxu0
        %s465 = scalar_lea.vmem %s188, 32 [#allocation2]
        %466 = vst.msk [vmem:[%s465] sm:$0xff] %vm349, %v459
        %467 = vst.msk [vmem:[%s465 + $0x8] sm:$0xff] %vm349, %v462
        %v468 = vpack.c.bf16 %v283, %v283
        %v469 = vld [vmem:[%s2] sm:$0xf]
        %v470 = vld [vmem:[%s2 + $0x4] sm:$0xf]
        %v473 = vunpack.c.l.b16 %v469
        %v474 = vunpack.c.l.b16 %v470
        %v475 = vpack.c.b16 %v474, %v473
        %v477 = vsel %vm223, %v475, 0
        %v480 = vsel %vm233, %v468, 0
        %482 = vmatprep.subr.bf16.mxu0 0
        %483 = vmatpush1.bf16.msra.mxu0 %v480
        %484 = vmatprep.subr.bf16.mxu0 0
        %485 = vmatpush1.bf16.msra.mxu0 0
        %486 = vmatprep.subr.bf16.mxu0 0
        %487 = vmatpush1.bf16.msra.mxu0 0
        %488 = vmatprep.subr.bf16.mxu0 0
        %489 = vmatpush1.bf16.msra.mxu0 0
        %490 = vmatprep.subr.bf16.mxu0 0
        %491 = vmatpush1.bf16.msra.mxu0 0
        %492 = vmatprep.subr.bf16.mxu0 0
        %493 = vmatpush1.bf16.msra.mxu0 0
        %494 = vmatprep.subr.bf16.mxu0 0
        %495 = vmatpush1.bf16.msra.mxu0 0
        %496 = vmatprep.subr.bf16.mxu0 0
        %497 = vmatpush1.bf16.msra.mxu0 0
        %498 = vmatprep.subr.bf16.mxu0 0
        %499 = vmatpush1.bf16.msra.mxu0 0
        %500 = vmatprep.subr.bf16.mxu0 0
        %501 = vmatpush1.bf16.msra.mxu0 0
        %502 = vmatprep.subr.bf16.mxu0 0
        %503 = vmatpush1.bf16.msra.mxu0 0
        %504 = vmatprep.subr.bf16.mxu0 0
        %505 = vmatpush1.bf16.msra.mxu0 0
        %506 = vmatprep.subr.bf16.mxu0 0
        %507 = vmatpush1.bf16.msra.mxu0 0
        %508 = vmatprep.subr.bf16.mxu0 0
        %509 = vmatpush1.bf16.msra.mxu0 0
        %510 = vmatprep.subr.bf16.mxu0 0
        %511 = vmatpush1.bf16.msra.mxu0 0
        %512 = vmatprep.subr.bf16.mxu0 0
        %513 = vmatpush1.bf16.msra.mxu0 0
        %514 = vmatprep.mubr.bf16.mxu0 0
        %515 = vmatmul.mubr.bf16.gmra.mrb[0].mxu0 %v477
        %v516 = vpop.f32.mrb[0].mxu0
        %v517 = vadd.f32 0.0, %v516
        %v518 = vpop.f32.mrb[0].mxu0
        %v519 = vpop.f32.mrb[0].mxu0
        %v520 = vadd.f32 0.0, %v519
        %v521 = vpop.f32.mrb[0].mxu0
        %522 = vdwg.mxu0
        %s523 = scalar_lea.vmem %s188, 48 [#allocation2]
        %524 = vst.msk [vmem:[%s523] sm:$0xff] %vm349, %v517
        %525 = vst.msk [vmem:[%s523 + $0x8] sm:$0xff] %vm349, %v520
        %v526 = vpack.c.bf16 %v288, %v288
        %v527 = vld [vmem:[%s2] sm:$0xf]
        %v528 = vld [vmem:[%s2 + $0x4] sm:$0xf]
        %v531 = vunpack.c.l.b16 %v527
        %v532 = vunpack.c.l.b16 %v528
        %v533 = vpack.c.b16 %v532, %v531
        %v535 = vsel %vm223, %v533, 0
        %v538 = vsel %vm233, %v526, 0
        %540 = vmatprep.subr.bf16.mxu0 0
        %541 = vmatpush1.bf16.msra.mxu0 %v538
        %542 = vmatprep.subr.bf16.mxu0 0
        %543 = vmatpush1.bf16.msra.mxu0 0
        %544 = vmatprep.subr.bf16.mxu0 0
        %545 = vmatpush1.bf16.msra.mxu0 0
        %546 = vmatprep.subr.bf16.mxu0 0
        %547 = vmatpush1.bf16.msra.mxu0 0
        %548 = vmatprep.subr.bf16.mxu0 0
        %549 = vmatpush1.bf16.msra.mxu0 0
        %550 = vmatprep.subr.bf16.mxu0 0
        %551 = vmatpush1.bf16.msra.mxu0 0
        %552 = vmatprep.subr.bf16.mxu0 0
        %553 = vmatpush1.bf16.msra.mxu0 0
        %554 = vmatprep.subr.bf16.mxu0 0
        %555 = vmatpush1.bf16.msra.mxu0 0
        %556 = vmatprep.subr.bf16.mxu0 0
        %557 = vmatpush1.bf16.msra.mxu0 0
        %558 = vmatprep.subr.bf16.mxu0 0
        %559 = vmatpush1.bf16.msra.mxu0 0
        %560 = vmatprep.subr.bf16.mxu0 0
        %561 = vmatpush1.bf16.msra.mxu0 0
        %562 = vmatprep.subr.bf16.mxu0 0
        %563 = vmatpush1.bf16.msra.mxu0 0
        %564 = vmatprep.subr.bf16.mxu0 0
        %565 = vmatpush1.bf16.msra.mxu0 0
        %566 = vmatprep.subr.bf16.mxu0 0
        %567 = vmatpush1.bf16.msra.mxu0 0
        %568 = vmatprep.subr.bf16.mxu0 0
        %569 = vmatpush1.bf16.msra.mxu0 0
        %570 = vmatprep.subr.bf16.mxu0 0
        %571 = vmatpush1.bf16.msra.mxu0 0
        %572 = vmatprep.mubr.bf16.mxu0 0
        %573 = vmatmul.mubr.bf16.gmra.mrb[0].mxu0 %v535
        %v574 = vpop.f32.mrb[0].mxu0
        %v575 = vadd.f32 0.0, %v574
        %v576 = vpop.f32.mrb[0].mxu0
        %v577 = vpop.f32.mrb[0].mxu0
        %v578 = vadd.f32 0.0, %v577
        %v579 = vpop.f32.mrb[0].mxu0
        %580 = vdwg.mxu0
        %s581 = scalar_lea.vmem %s188, 64 [#allocation2]
        %582 = vst.msk [vmem:[%s581] sm:$0xff] %vm349, %v575
        %583 = vst.msk [vmem:[%s581 + $0x8] sm:$0xff] %vm349, %v578
        %v584 = vpack.c.bf16 %v291, %v291
        %v585 = vld [vmem:[%s2] sm:$0xf]
        %v586 = vld [vmem:[%s2 + $0x4] sm:$0xf]
        %v589 = vunpack.c.l.b16 %v585
        %v590 = vunpack.c.l.b16 %v586
        %v591 = vpack.c.b16 %v590, %v589
        %v593 = vsel %vm223, %v591, 0
        %v596 = vsel %vm233, %v584, 0
        %598 = vmatprep.subr.bf16.mxu0 0
        %599 = vmatpush1.bf16.msra.mxu0 %v596
        %600 = vmatprep.subr.bf16.mxu0 0
        %601 = vmatpush1.bf16.msra.mxu0 0
        %602 = vmatprep.subr.bf16.mxu0 0
        %603 = vmatpush1.bf16.msra.mxu0 0
        %604 = vmatprep.subr.bf16.mxu0 0
        %605 = vmatpush1.bf16.msra.mxu0 0
        %606 = vmatprep.subr.bf16.mxu0 0
        %607 = vmatpush1.bf16.msra.mxu0 0
        %608 = vmatprep.subr.bf16.mxu0 0
        %609 = vmatpush1.bf16.msra.mxu0 0
        %610 = vmatprep.subr.bf16.mxu0 0
        %611 = vmatpush1.bf16.msra.mxu0 0
        %612 = vmatprep.subr.bf16.mxu0 0
        %613 = vmatpush1.bf16.msra.mxu0 0
        %614 = vmatprep.subr.bf16.mxu0 0
        %615 = vmatpush1.bf16.msra.mxu0 0
        %616 = vmatprep.subr.bf16.mxu0 0
        %617 = vmatpush1.bf16.msra.mxu0 0
        %618 = vmatprep.subr.bf16.mxu0 0
        %619 = vmatpush1.bf16.msra.mxu0 0
        %620 = vmatprep.subr.bf16.mxu0 0
        %621 = vmatpush1.bf16.msra.mxu0 0
        %622 = vmatprep.subr.bf16.mxu0 0
        %623 = vmatpush1.bf16.msra.mxu0 0
        %624 = vmatprep.subr.bf16.mxu0 0
        %625 = vmatpush1.bf16.msra.mxu0 0
        %626 = vmatprep.subr.bf16.mxu0 0
        %627 = vmatpush1.bf16.msra.mxu0 0
        %628 = vmatprep.subr.bf16.mxu0 0
        %629 = vmatpush1.bf16.msra.mxu0 0
        %630 = vmatprep.mubr.bf16.mxu0 0
        %631 = vmatmul.mubr.bf16.gmra.mrb[0].mxu0 %v593
        %v632 = vpop.f32.mrb[0].mxu0
        %v633 = vadd.f32 0.0, %v632
        %v634 = vpop.f32.mrb[0].mxu0
        %v635 = vpop.f32.mrb[0].mxu0
        %v636 = vadd.f32 0.0, %v635
        %v637 = vpop.f32.mrb[0].mxu0
        %638 = vdwg.mxu0
        %s639 = scalar_lea.vmem %s188, 80 [#allocation2]
        %640 = vst.msk [vmem:[%s639] sm:$0xff] %vm349, %v633
        %641 = vst.msk [vmem:[%s639 + $0x8] sm:$0xff] %vm349, %v636
        %s642 = sand.u32 %s109, 1
        %s643 = scalar_lea.sflag [#allocation3], %s642
        %s644 = sand.u32 %s109, 1
        %s645 = smul.addr %s644, 96
        %s646 = scalar_lea.vmem [#allocation2], %s645
        // Predicated region
        $region33: #{simple_segmentation_forward.3} parent=31 // pred_check
          %p647 = pneg %p119
        $region34: #{simple_segmentation_forward.3} parent=31 // pred_check_branch
          %649 = sbr.rel (%p647) target = $region36
        $region35: #{simple_segmentation_forward.3} parent=31 // pred_region
          %s650 = smul.u32 6, %s22
          %s652 = ssub.s32 1536, 1536
          %653 = vsyncadd %s643, %s652
          %s654 = smul.addr %s650, 2
          %s655 = smul.addr %s21, 12
          %s656 = sadd.s32 %s654, %s655
          %s657 = smul.addr %s656, 128
          %s658 = scalar_lea.hbm %s3, %s657
          %s659 = sshll.u32 %s646, 4
          %s660 = int_to_ptr.vmem [resolvable:$true] %s659
          %665 = dma.vmem_to_hbm [thread:$0]  %s660, 1536, %s658, %s643, 128, 128, 8
        $region36: #{simple_segmentation_forward.3} parent=31 // pred_fallthru
          _
      $region32: #{simple_segmentation_forward.3} parent=5 // pred_fallthru
        _
      %p666 = scmp.le.s32.totalorder 2, %s12
      // Predicated region
      $region37: #{simple_segmentation_forward.3} parent=5 // pred_check
        %p667 = pneg %p666
      $region38: #{simple_segmentation_forward.3} parent=5 // pred_check_branch
        %669 = sbr.rel (%p667) target = $region40
      $region39: #{simple_segmentation_forward.3} parent=5 // pred_region
        %s670 = ssub.s32 %s12, 2
        // Predicated region
        $region41: #{simple_segmentation_forward.3} parent=39 // pred_check
          %p671 = pneg %p125
        $region42: #{simple_segmentation_forward.3} parent=39 // pred_check_branch
          %673 = sbr.rel (%p671) target = $region44
        $region43: #{simple_segmentation_forward.3} parent=39 // pred_region
          %s674 = sand.u32 %s110, 1
          %s675 = scalar_lea.sflag [#allocation3], %s674
          %s676 = sand.u32 %s110, 1
          %s677 = smul.addr %s676, 96
          %s678 = scalar_lea.vmem [#allocation2], %s677
          %679 = dma.done %s675, 1536
        $region44: #{simple_segmentation_forward.3} parent=39 // pred_fallthru
          _
      $region40: #{simple_segmentation_forward.3} parent=5 // pred_fallthru
        _
    $region6: #{simple_segmentation_forward.3} parent=1 // loop_footer
      %s16 = sadd.s32 1, %s12
    $region7: #{simple_segmentation_forward.3} parent=1 // loop_footer_branch
      %11 = sbr.rel target = $region3
    $region8: #{simple_segmentation_forward.3} parent=1 // loop_exit
      _
    %680 = vsyncpa [#allocation3], 1
    %s681 = scalar_lea.sflag [#allocation3], 1
    %682 = vsyncpa %s681, 1

</llo_original>
